<compile_context>
chip_gen: v6e
topology: v6e:2x2x1
jax: 0.10.0
libtpu: 0.0.40
codegen_flags: <defaults>
</compile_context>

<pallas_src>
import functools
import math

import jax
import jax.numpy as jnp
from jax.experimental import pallas as pl
from jax.experimental.pallas import tpu as pltpu


def _arcface_kernel(lab_smem, emb_ref, ker_ref, inv_row_ref, lab_ref, out_ref, *,
                    s, cos_m, sin_m, mm, threshold, tc, batch):
    """One class-tile of the ArcFace head.

    lab_smem    : (B,)    int32  labels in SMEM (scalar prefetch) -> tile-skip test
    emb_ref     : (B, E)  bf16   raw embeddings (resident across the grid)
    ker_ref     : (E, tc) bf16   class-kernel column tile
    inv_row_ref : (B, 1)  f32    1/||emb_row||_2 (hoisted to the wrapper)
    lab_ref     : (B, 1)  int32  labels as a tiny resident vector (one-hot mask)
    out_ref     : (B, tc) f32    scaled logits
    """
    j = pl.program_id(0)
    col_lo = j * tc
    col_hi = col_lo + tc

    # Column inverse norms of this tile, computed in f32 from the already-resident
    # bf16 block (XLU reduction + EUP rsqrt -> off the VALU/MXU critical path).
    ker = ker_ref[...]
    kf = ker.astype(jnp.float32)
    col_sq = jnp.sum(kf * kf, axis=0, keepdims=True)                 # (1, tc)
    inv_col = jax.lax.rsqrt(jnp.maximum(col_sq, 1e-12))

    # bf16 x bf16 MXU matmul with f32 accumulation; fold both normalizations in
    # afterwards (mathematically identical to normalizing the operands first).
    raw = jnp.dot(emb_ref[...], ker, preferred_element_type=jnp.float32)  # (B, tc)
    cos_theta = jnp.clip(raw * inv_row_ref[...] * inv_col, -1.0, 1.0)
    plain = cos_theta * s

    # Does any label of the batch land inside this class tile?  (scalar scan over
    # the SMEM labels; for classnum >> batch most tiles skip the margin math.)
    def _scan(i, acc):
        li = lab_smem[i]
        hit = jnp.logical_and(li >= col_lo, li < col_hi)
        return acc | hit.astype(jnp.int32)

    any_hit = jax.lax.fori_loop(0, batch, _scan, jnp.int32(0)) > 0

    @pl.when(jnp.logical_not(any_hit))
    def _():
        out_ref[...] = plain.astype(out_ref.dtype)

    @pl.when(any_hit)
    def _():
        sin_theta = jnp.sqrt(jnp.maximum(1.0 - cos_theta * cos_theta, 0.0))
        cos_theta_m = cos_theta * cos_m - sin_theta * sin_m
        # easy-margin fallback: where cos_theta <= threshold use cos_theta - mm
        cos_theta_m = jnp.where((cos_theta - threshold) <= 0.0,
                                cos_theta - mm, cos_theta_m)
        col_ids = jax.lax.broadcasted_iota(jnp.int32, cos_theta.shape, 1) + col_lo
        label_mask = lab_ref[...] == col_ids                        # (B,1) vs (B,tc)
        out_ref[...] = jnp.where(label_mask, cos_theta_m * s, plain).astype(out_ref.dtype)


def arcface_forward(embeddings, kernel, label, *, s=64.0, m=0.5, tc=512):
    """Pallas implementation of Arcface.forward(embeddings, label)."""
    B, E = embeddings.shape
    E2, C = kernel.shape
    assert E == E2, "embedding dim mismatch"
    assert tc % 128 == 0, "class tile must be a multiple of the lane width"

    cos_m = math.cos(m)
    sin_m = math.sin(m)
    mm = sin_m * m
    threshold = math.cos(math.pi - m)

    # Hoisted row norms: computed once in f32 (not once per class tile).
    emb_f32 = embeddings.astype(jnp.float32)
    inv_row = jax.lax.rsqrt(
        jnp.maximum(jnp.sum(emb_f32 * emb_f32, axis=1, keepdims=True), 1e-12))

    # bf16 MXU inputs: halves the dominant HBM stream (the class-kernel read).
    emb_bf16 = emb_f32.astype(jnp.bfloat16)
    ker_bf16 = kernel.astype(jnp.bfloat16)

    # Pad classnum up to a multiple of tc.  Pad columns with ONES so the padded
    # column norms are sqrt(E) (no 0/0 -> NaN); they can never match a label and
    # the padded logits are sliced off below.
    c_pad = ((C + tc - 1) // tc) * tc
    if c_pad != C:
        ker_bf16 = jnp.concatenate(
            [ker_bf16, jnp.ones((E, c_pad - C), jnp.bfloat16)], axis=1)

    labels_i32 = label.astype(jnp.int32)
    lab2d = labels_i32.reshape(B, 1)

    kern = functools.partial(
        _arcface_kernel,
        s=s, cos_m=cos_m, sin_m=sin_m, mm=mm, threshold=threshold,
        tc=tc, batch=B,
    )

    # VMEM budget (generation-aware: stays well inside v7x's 64 MiB physical VMEM).
    vmem_bytes = (
        2 * E * tc * 2            # double-buffered bf16 class-kernel tile
        + B * E * 2               # resident bf16 embeddings
        + 2 * B * tc * 4          # double-buffered f32 output tile
        + 4 * 8 * 128 * 4         # padded tiny (B, 1) blocks (labels, inv_row)
    )
    vmem_limit = int(min(64 * 2**20, max(16 * 2**20, 4 * vmem_bytes)))

    out = pl.pallas_call(
        kern,
        out_shape=jax.ShapeDtypeStruct((B, c_pad), jnp.float32),
        grid_spec=pltpu.PrefetchScalarGridSpec(
            num_scalar_prefetch=1,
            grid=(c_pad // tc,),
            in_specs=[
                pl.BlockSpec((B, E), lambda j, lab: (0, 0)),    # embeddings (resident)
                pl.BlockSpec((E, tc), lambda j, lab: (0, j)),   # class-kernel tile
                pl.BlockSpec((B, 1), lambda j, lab: (0, 0)),    # inv row norms
                pl.BlockSpec((B, 1), lambda j, lab: (0, 0)),    # labels (vector form)
            ],
            out_specs=pl.BlockSpec((B, tc), lambda j, lab: (0, j)),
        ),
        compiler_params=pltpu.CompilerParams(
            dimension_semantics=("parallel",),
            vmem_limit_bytes=vmem_limit,
        ),
    )(labels_i32, emb_bf16, ker_bf16, inv_row, lab2d)

    return out[:, :C]


def _reference_f32(embeddings, kernel, label, *, s=64.0, m=0.5):
    """Pure-JAX f32 reference (mirrors the PyTorch forward)."""
    cos_m, sin_m = math.cos(m), math.sin(m)
    mm, threshold = sin_m * m, math.cos(math.pi - m)
    ker_n = kernel / jnp.linalg.norm(kernel, axis=0, keepdims=True)
    emb_n = embeddings / jnp.linalg.norm(embeddings, axis=1, keepdims=True)
    cos = jnp.clip(emb_n @ ker_n, -1.0, 1.0)
    sin = jnp.sqrt(jnp.maximum(1.0 - cos * cos, 0.0))
    cos_m_theta = cos * cos_m - sin * sin_m
    cos_m_theta = jnp.where((cos - threshold) <= 0.0, cos - mm, cos_m_theta)
    onehot = jax.nn.one_hot(label, kernel.shape[1], dtype=jnp.bool_)
    return jnp.where(onehot, cos_m_theta, cos) * s


def _reference_bf16(embeddings, kernel, label, *, s=64.0, m=0.5):
    """Pure-JAX reference matching the kernel's numerics (bf16 MXU operands,
    post-matmul normalization, f32 margin math)."""
    cos_m, sin_m = math.cos(m), math.sin(m)
    mm, threshold = sin_m * m, math.cos(math.pi - m)
    emb_f32 = embeddings.astype(jnp.float32)
    inv_row = jax.lax.rsqrt(
        jnp.maximum(jnp.sum(emb_f32 * emb_f32, axis=1, keepdims=True), 1e-12))
    emb_q = emb_f32.astype(jnp.bfloat16).astype(jnp.float32)
    ker_q = kernel.astype(jnp.bfloat16).astype(jnp.float32)
    inv_col = jax.lax.rsqrt(
        jnp.maximum(jnp.sum(ker_q * ker_q, axis=0, keepdims=True), 1e-12))
    raw = jnp.dot(emb_q, ker_q, preferred_element_type=jnp.float32)
    cos = jnp.clip(raw * inv_row * inv_col, -1.0, 1.0)
    sin = jnp.sqrt(jnp.maximum(1.0 - cos * cos, 0.0))
    cos_m_theta = cos * cos_m - sin * sin_m
    cos_m_theta = jnp.where((cos - threshold) <= 0.0, cos - mm, cos_m_theta)
    onehot = jax.nn.one_hot(label, kernel.shape[1], dtype=jnp.bool_)
    return jnp.where(onehot, cos_m_theta, cos) * s


if __name__ == "__main__":
    # Small shapes consistent with the module: embedding_size=512 (as in Arcface),
    # classnum=1000 (deliberately NOT a multiple of 128 to exercise the padding).
    B, E, C = 8, 512, 1000
    s_scale, margin = 64.0, 0.5

    key = jax.random.PRNGKey(0)
    k_emb, k_ker, k_lab = jax.random.split(key, 3)

    # Deterministic parameter init: kernel ~ N(0, sqrt(3 / classnum))
    kernel = jax.random.normal(k_ker, (E, C), jnp.float32) * math.sqrt(3.0 / C)
    embeddings = jax.random.normal(k_emb, (B, E), jnp.float32)
    label = jax.random.randint(k_lab, (B,), 0, C, jnp.int32)

    fwd = jax.jit(functools.partial(arcface_forward, s=s_scale, m=margin, tc=512))
    out = jax.block_until_ready(fwd(embeddings, kernel, label))

    assert out.shape == (B, C) and out.dtype == jnp.float32

    # Tight check against a reference with identical numerics (bf16 operands,
    # post-matmul normalization).
    ref_q = _reference_bf16(embeddings, kernel, label, s=s_scale, m=margin)
    assert jnp.allclose(out, ref_q, atol=1e-2, rtol=1e-3), "mismatch vs bf16 reference"

    # Loose sanity check against the full-precision PyTorch-style reference.
    ref_f = _reference_f32(embeddings, kernel, label, s=s_scale, m=margin)
    assert jnp.allclose(out, ref_f, atol=0.25, rtol=5e-2), "mismatch vs f32 reference"

    print("KERNEL_OK")
</pallas_src>

<mosaic_0001>
module attributes {stable_mosaic.version = 11 : i64} {
  func.func @_arcface_kernel(%arg0: i32, %arg1: memref<8xi32, #tpu.memory_space<smem>>, %arg2: memref<8x512xbf16, #tpu.memory_space<vmem>>, %arg3: memref<512x512xbf16, #tpu.memory_space<vmem>>, %arg4: memref<8x1xf32, #tpu.memory_space<vmem>>, %arg5: memref<8x1xi32, #tpu.memory_space<vmem>>, %arg6: memref<8x512xf32, #tpu.memory_space<vmem>>) attributes {dimension_semantics = [#tpu.dimension_semantics<parallel>], iteration_bounds = array<i64: 2>, scalar_prefetch = 1 : i64, scratch_operands = 0 : i64, tpu.core_type = #tpu.core_type<tc>, window_params = [{pipeline_mode = #tpu.pipeline_mode<synchronous>, transform_indices = @transform_0, window_bounds = array<i64: 8, 512>}, {transform_indices = @transform_1, window_bounds = array<i64: 512, 512>}, {pipeline_mode = #tpu.pipeline_mode<synchronous>, transform_indices = @transform_2, window_bounds = array<i64: 8, 1>}, {pipeline_mode = #tpu.pipeline_mode<synchronous>, transform_indices = @transform_3, window_bounds = array<i64: 8, 1>}, {transform_indices = @transform_4, window_bounds = array<i64: 8, 512>}]} {
    %c512_i32 = arith.constant 512 : i32
    %0 = arith.muli %arg0, %c512_i32 : i32
    %c512_i32_0 = arith.constant 512 : i32
    %1 = arith.addi %0, %c512_i32_0 : i32
    %c0 = arith.constant 0 : index
    %c0_1 = arith.constant 0 : index
    %2 = vector.load %arg3[%c0, %c0_1] : memref<512x512xbf16, #tpu.memory_space<vmem>>, vector<512x512xbf16>
    %3 = arith.extf %2 : vector<512x512xbf16> to vector<512x512xf32>
    %4 = arith.mulf %3, %3 : vector<512x512xf32>
    %cst = arith.constant dense<0.000000e+00> : vector<512xf32>
    %5 = vector.multi_reduction <add>, %4, %cst [0] : vector<512x512xf32> to vector<512xf32>
    %6 = vector.shape_cast %5 : vector<512xf32> to vector<1x512xf32>
    %cst_2 = arith.constant 9.99999996E-13 : f32
    %7 = vector.broadcast %cst_2 : f32 to vector<1x512xf32>
    %8 = arith.maximumf %6, %7 : vector<1x512xf32>
    %9 = math.rsqrt %8 : vector<1x512xf32>
    %c0_3 = arith.constant 0 : index
    %c0_4 = arith.constant 0 : index
    %10 = vector.load %arg2[%c0_3, %c0_4] : memref<8x512xbf16, #tpu.memory_space<vmem>>, vector<8x512xbf16>
    %cst_5 = arith.constant dense<0.000000e+00> : vector<8x512xf32>
    %11 = tpu.matmul %10, %2, %cst_5 {dimension_numbers = #tpu.dot_dimension_numbers<[1], [0], [0], [1], [0, 0, 1, 1], [], []>} : vector<8x512xbf16>, vector<512x512xbf16>, vector<8x512xf32> -> vector<8x512xf32>
    %c0_6 = arith.constant 0 : index
    %c0_7 = arith.constant 0 : index
    %12 = vector.load %arg4[%c0_6, %c0_7] : memref<8x1xf32, #tpu.memory_space<vmem>>, vector<8x1xf32>
    %13 = vector.broadcast %12 : vector<8x1xf32> to vector<8x512xf32>
    %14 = arith.mulf %11, %13 : vector<8x512xf32>
    %15 = vector.broadcast %9 : vector<1x512xf32> to vector<8x512xf32>
    %16 = arith.mulf %14, %15 : vector<8x512xf32>
    %cst_8 = arith.constant -1.000000e+00 : f32
    %cst_9 = arith.constant 1.000000e+00 : f32
    %17 = vector.broadcast %cst_8 : f32 to vector<8x512xf32>
    %18 = arith.maximumf %17, %16 : vector<8x512xf32>
    %19 = vector.broadcast %cst_9 : f32 to vector<8x512xf32>
    %20 = arith.minimumf %19, %18 : vector<8x512xf32>
    %cst_10 = arith.constant 6.400000e+01 : f32
    %21 = vector.broadcast %cst_10 : f32 to vector<8x512xf32>
    %22 = arith.mulf %20, %21 : vector<8x512xf32>
    %c0_i32 = arith.constant 0 : i32
    %c0_i32_11 = arith.constant 0 : i32
    %c8_i32 = arith.constant 8 : i32
    %23 = arith.addi %c0_i32_11, %c8_i32 : i32
    %c1_i32 = arith.constant 1 : i32
    %24 = scf.for %arg7 = %c0_i32_11 to %23 step %c1_i32 iter_args(%arg8 = %c0_i32) -> (i32)  : i32 {
      %31 = arith.index_cast %arg7 : i32 to index
      %32 = memref.load %arg1[%31] : memref<8xi32, #tpu.memory_space<smem>>
      %33 = arith.cmpi sge, %32, %0 : i32
      %34 = arith.cmpi slt, %32, %1 : i32
      %35 = arith.andi %33, %34 : i1
      %36 = arith.extui %35 : i1 to i32
      %37 = arith.ori %arg8, %36 : i32
      scf.yield %37 : i32
    }
    %c8_i32_12 = arith.constant 8 : i32
    %c0_i32_13 = arith.constant 0 : i32
    %25 = arith.cmpi sgt, %24, %c0_i32_13 : i32
    %true = arith.constant true
    %26 = arith.xori %25, %true : i1
    %27 = arith.extui %26 : i1 to i32
    %c0_i32_14 = arith.constant 0 : i32
    %28 = arith.cmpi ne, %27, %c0_i32_14 : i32
    scf.if %28 {
      %c0_16 = arith.constant 0 : index
      %c0_17 = arith.constant 0 : index
      %31 = vector.load %arg6[%c0_16, %c0_17] : memref<8x512xf32, #tpu.memory_space<vmem>>, vector<8x512xf32>
      tpu.vector_store %arg6[%c0_16, %c0_17], %22 {strides = array<i32>} : memref<8x512xf32, #tpu.memory_space<vmem>>, vector<8x512xf32>,
    } else {
    }
    %29 = arith.extui %25 : i1 to i32
    %c0_i32_15 = arith.constant 0 : i32
    %30 = arith.cmpi ne, %29, %c0_i32_15 : i32
    scf.if %30 {
      %31 = arith.mulf %20, %20 : vector<8x512xf32>
      %cst_16 = arith.constant 1.000000e+00 : f32
      %32 = vector.broadcast %cst_16 : f32 to vector<8x512xf32>
      %33 = arith.subf %32, %31 : vector<8x512xf32>
      %cst_17 = arith.constant 0.000000e+00 : f32
      %34 = vector.broadcast %cst_17 : f32 to vector<8x512xf32>
      %35 = arith.maximumf %33, %34 : vector<8x512xf32>
      %36 = math.sqrt %35 : vector<8x512xf32>
      %cst_18 = arith.constant 0.87758255 : f32
      %37 = vector.broadcast %cst_18 : f32 to vector<8x512xf32>
      %38 = arith.mulf %20, %37 : vector<8x512xf32>
      %cst_19 = arith.constant 0.47942555 : f32
      %39 = vector.broadcast %cst_19 : f32 to vector<8x512xf32>
      %40 = arith.mulf %36, %39 : vector<8x512xf32>
      %41 = arith.subf %38, %40 : vector<8x512xf32>
      %cst_20 = arith.constant -0.87758255 : f32
      %42 = vector.broadcast %cst_20 : f32 to vector<8x512xf32>
      %43 = arith.subf %20, %42 : vector<8x512xf32>
      %cst_21 = arith.constant 0.000000e+00 : f32
      %44 = vector.broadcast %cst_21 : f32 to vector<8x512xf32>
      %45 = arith.cmpf ole, %43, %44 : vector<8x512xf32>
      %cst_22 = arith.constant 0.239712775 : f32
      %46 = vector.broadcast %cst_22 : f32 to vector<8x512xf32>
      %47 = arith.subf %20, %46 : vector<8x512xf32>
      %48 = arith.select %45, %47, %41 : vector<8x512xi1>, vector<8x512xf32>
      %49 = tpu.iota {dimensions = array<i32: 1>} : vector<8x512xi32>
      %50 = vector.broadcast %0 : i32 to vector<8x512xi32>
      %51 = arith.addi %49, %50 : vector<8x512xi32>
      %c0_23 = arith.constant 0 : index
      %c0_24 = arith.constant 0 : index
      %52 = vector.load %arg5[%c0_23, %c0_24] : memref<8x1xi32, #tpu.memory_space<vmem>>, vector<8x1xi32>
      %53 = vector.broadcast %52 : vector<8x1xi32> to vector<8x512xi32>
      %54 = arith.cmpi eq, %53, %51 : vector<8x512xi32>
      %cst_25 = arith.constant 6.400000e+01 : f32
      %55 = vector.broadcast %cst_25 : f32 to vector<8x512xf32>
      %56 = arith.mulf %48, %55 : vector<8x512xf32>
      %57 = arith.select %54, %56, %22 : vector<8x512xi1>, vector<8x512xf32>
      %c0_26 = arith.constant 0 : index
      %c0_27 = arith.constant 0 : index
      %58 = vector.load %arg6[%c0_26, %c0_27] : memref<8x512xf32, #tpu.memory_space<vmem>>, vector<8x512xf32>
      tpu.vector_store %arg6[%c0_26, %c0_27], %57 {strides = array<i32>} : memref<8x512xf32, #tpu.memory_space<vmem>>, vector<8x512xf32>,
    } else {
    }
    return
  }
  func.func @transform_0(%arg0: i32, %arg1: memref<8xi32, #tpu.memory_space<smem>>) -> (i32, i32) {
    %c0_i32 = arith.constant 0 : i32
    %c0_i32_0 = arith.constant 0 : i32
    %c0_i32_1 = arith.constant 0 : i32
    return %c0_i32, %c0_i32_0 : i32, i32
  }
  func.func @transform_1(%arg0: i32, %arg1: memref<8xi32, #tpu.memory_space<smem>>) -> (i32, i32) {
    %c0_i32 = arith.constant 0 : i32
    %c0_i32_0 = arith.constant 0 : i32
    return %c0_i32, %arg0 : i32, i32
  }
  func.func @transform_2(%arg0: i32, %arg1: memref<8xi32, #tpu.memory_space<smem>>) -> (i32, i32) {
    %c0_i32 = arith.constant 0 : i32
    %c0_i32_0 = arith.constant 0 : i32
    %c0_i32_1 = arith.constant 0 : i32
    return %c0_i32, %c0_i32_0 : i32, i32
  }
  func.func @transform_3(%arg0: i32, %arg1: memref<8xi32, #tpu.memory_space<smem>>) -> (i32, i32) {
    %c0_i32 = arith.constant 0 : i32
    %c0_i32_0 = arith.constant 0 : i32
    %c0_i32_1 = arith.constant 0 : i32
    return %c0_i32, %c0_i32_0 : i32, i32
  }
  func.func @transform_4(%arg0: i32, %arg1: memref<8xi32, #tpu.memory_space<smem>>) -> (i32, i32) {
    %c0_i32 = arith.constant 0 : i32
    %c0_i32_0 = arith.constant 0 : i32
    return %c0_i32, %arg0 : i32, i32
  }
}

</mosaic_0001>

<llo_original>
// kernel: arcface_forward.1
$region0: #{arcface_forward.1}
  #allocation0 [shape = 'u32[]', space=smem, size = 0x4, offset = 0x4, fixed_abs, tag = 'smem constant byte address 0x4 - core index']
  #allocation1 [shape = 'u32[144,128]{1,0:T(1,128)}', space=vmem, size = 0x12000, scoped, tag = 'internal scratch']
  #allocation2 [shape = 's32[1]{0}', space=sflag, size = 0x4, scoped, tag = 'scoped memory for arcface_forward.1']
  #allocation3 [shape = 'u8[512]{0}', space=smem, size = 0x200, scoped, tag = 'prefetched SMEM operand 0']
  %s0 = inlined_call_operand.vmem [shape: s32[8], index: 0, kind: input, shape index: {}]
  %s1 = inlined_call_operand.vmem [shape: bf16[8,512], index: 1, kind: input, shape index: {}]
  %s2 = inlined_call_operand.vmem [shape: bf16[512,1024], index: 2, kind: input, shape index: {}]
  %s3 = inlined_call_operand.vmem [shape: f32[8,1], index: 3, kind: input, shape index: {}]
  %s4 = inlined_call_operand.vmem [shape: s32[8,1], index: 4, kind: input, shape index: {}]
  %s5 = inlined_call_operand.hbm [shape: f32[8,1024], index: 5, kind: output, shape index: {}]
  %s6 = sld [smem:[#allocation0]]
  $region87: #{arcface_forward.1} parent=0
    _
  %s8 = ssub.s32 1, %s6
  %s9 = scalar_select 0, %s8, %s6
  %s10 = sshll.u32 %s0, 4
  %s11 = int_to_ptr.vmem [resolvable:$true] %s10
  %13 = dma.vmem_to_smem %s11, 16, [#allocation3], [#allocation2]
  %14 = dma.done [#allocation2], 16
  %15 = sfence
  $region1: #{arcface_forward.1} parent=0
    #allocation4 [shape = 'u8[1048576]{0}', space=vmem, size = 0x100000, scoped, tag = 'input window, operand 2']
    #allocation5 [shape = 'u8[32768]{0}', space=vmem, size = 0x8000, scoped, tag = 'output window, operand 0']
    #allocation6 [shape = 's32[2]{0}', space=sflag, size = 0x8, scoped, tag = 'scoped memory for arcface_forward.1']
    %16 = vsyncpa [#allocation6], 0
    %s17 = scalar_lea.sflag [#allocation6], 1
    %18 = vsyncpa %s17, 0
    loop: start=0, step=1, limit=4
    $region2: #{arcface_forward.1} parent=1 // loop_pre_header
      _
    $region3: #{arcface_forward.1} parent=1 // loop_header
      %s20 = sphi 0, %s24
      %p21 = scmp.ge.s32.totalorder %s20, 4
      %s28 = sphi 0, %s28
      %s30 = sphi 0, %s28
      %s31 = sphi 0, %s30
      %s45 = sphi 0, %s31
      %s51 = sphi 0, %s53
      %s54 = sphi 0, %s51
      %s55 = sphi 0, %s54
      %s71 = sphi 0, %s55
      %s75 = sphi 0, %s75
      %s77 = sphi 0, %s75
      %s78 = sphi 0, %s77
      %s92 = sphi 0, %s78
      %s96 = sphi 0, %s96
      %s98 = sphi 0, %s96
      %s99 = sphi 0, %s98
      %s113 = sphi 0, %s99
      %s119 = sphi 0, %s121
      %s122 = sphi 0, %s119
      %s123 = sphi 0, %s122
      %s139 = sphi 0, %s123
    $region4: #{arcface_forward.1} parent=1 // loop_header_branch
      %23 = sbr.rel (%p21) target = $region8
    $region5: #{arcface_forward.1} parent=1 // loop_body
      %s25 = ssub.s32 %s20, 1
      %s26 = ssub.s32 %s20, 2
      %s27 = sadd.s32 %s20, 1
      %s29 = sadd.s32 %s28, 1
      %p32 = scmp.eq.s32.totalorder %s20, 1
      %p33 = scmp.ne.s32.totalorder %s28, %s30
      %p34 = scmp.eq.s32.totalorder %s20, 0
      %p35 = por %p33, %p34
      %p36 = scmp.ne.s32.totalorder %s28, %s30
      %p37 = scmp.eq.s32.totalorder %s25, 1
      %p38 = por %p36, %p37
      %p39 = scmp.ne.s32.totalorder %s30, %s31
      %p40 = scmp.eq.s32.totalorder %s25, 0
      %p41 = por %p39, %p40
      %p42 = scmp.ne.s32.totalorder %s30, %s31
      %p43 = scmp.eq.s32.totalorder %s26, 1
      %p44 = por %p42, %p43
      %p46 = scmp.ne.s32.totalorder %s31, %s45
      %p47 = scmp.eq.s32.totalorder %s26, 0
      %p48 = por %p46, %p47
      %s49 = ssub.s32 %s20, %s27
      %p50 = scmp.eq.s32.totalorder %s49, 0
      %s52 = sadd.s32 %s51, 1
      %s53 = scalar_select %p50, %s51, %s52
      %p56 = pneg %p50
      %p57 = scmp.eq.s32.totalorder %s20, 1
      %p58 = por %p56, %p57
      %p59 = scmp.ne.s32.totalorder %s51, %s54
      %p60 = scmp.eq.s32.totalorder %s20, 0
      %p61 = por %p59, %p60
      %p62 = scmp.ne.s32.totalorder %s51, %s54
      %p63 = scmp.eq.s32.totalorder %s25, 1
      %p64 = por %p62, %p63
      %p65 = scmp.ne.s32.totalorder %s54, %s55
      %p66 = scmp.eq.s32.totalorder %s25, 0
      %p67 = por %p65, %p66
      %p68 = scmp.ne.s32.totalorder %s54, %s55
      %p69 = scmp.eq.s32.totalorder %s26, 1
      %p70 = por %p68, %p69
      %p72 = scmp.ne.s32.totalorder %s55, %s71
      %p73 = scmp.eq.s32.totalorder %s26, 0
      %p74 = por %p72, %p73
      %s76 = sadd.s32 %s75, 1
      %p79 = scmp.eq.s32.totalorder %s20, 1
      %p80 = scmp.ne.s32.totalorder %s75, %s77
      %p81 = scmp.eq.s32.totalorder %s20, 0
      %p82 = por %p80, %p81
      %p83 = scmp.ne.s32.totalorder %s75, %s77
      %p84 = scmp.eq.s32.totalorder %s25, 1
      %p85 = por %p83, %p84
      %p86 = scmp.ne.s32.totalorder %s77, %s78
      %p87 = scmp.eq.s32.totalorder %s25, 0
      %p88 = por %p86, %p87
      %p89 = scmp.ne.s32.totalorder %s77, %s78
      %p90 = scmp.eq.s32.totalorder %s26, 1
      %p91 = por %p89, %p90
      %p93 = scmp.ne.s32.totalorder %s78, %s92
      %p94 = scmp.eq.s32.totalorder %s26, 0
      %p95 = por %p93, %p94
      %s97 = sadd.s32 %s96, 1
      %p100 = scmp.eq.s32.totalorder %s20, 1
      %p101 = scmp.ne.s32.totalorder %s96, %s98
      %p102 = scmp.eq.s32.totalorder %s20, 0
      %p103 = por %p101, %p102
      %p104 = scmp.ne.s32.totalorder %s96, %s98
      %p105 = scmp.eq.s32.totalorder %s25, 1
      %p106 = por %p104, %p105
      %p107 = scmp.ne.s32.totalorder %s98, %s99
      %p108 = scmp.eq.s32.totalorder %s25, 0
      %p109 = por %p107, %p108
      %p110 = scmp.ne.s32.totalorder %s98, %s99
      %p111 = scmp.eq.s32.totalorder %s26, 1
      %p112 = por %p110, %p111
      %p114 = scmp.ne.s32.totalorder %s99, %s113
      %p115 = scmp.eq.s32.totalorder %s26, 0
      %p116 = por %p114, %p115
      %s117 = ssub.s32 %s20, %s27
      %p118 = scmp.eq.s32.totalorder %s117, 0
      %s120 = sadd.s32 %s119, 1
      %s121 = scalar_select %p118, %s119, %s120
      %p124 = pneg %p118
      %p125 = scmp.eq.s32.totalorder %s20, 1
      %p126 = por %p124, %p125
      %p127 = scmp.ne.s32.totalorder %s119, %s122
      %p128 = scmp.eq.s32.totalorder %s20, 0
      %p129 = por %p127, %p128
      %p130 = scmp.ne.s32.totalorder %s119, %s122
      %p131 = scmp.eq.s32.totalorder %s25, 1
      %p132 = por %p130, %p131
      %p133 = scmp.ne.s32.totalorder %s122, %s123
      %p134 = scmp.eq.s32.totalorder %s25, 0
      %p135 = por %p133, %p134
      %p136 = scmp.ne.s32.totalorder %s122, %s123
      %p137 = scmp.eq.s32.totalorder %s26, 1
      %p138 = por %p136, %p137
      %p140 = scmp.ne.s32.totalorder %s123, %s139
      %p141 = scmp.eq.s32.totalorder %s26, 0
      %p142 = por %p140, %p141
      %p143 = scmp.le.s32.totalorder 1, %s20
      %p144 = scmp.lt.s32.totalorder %s20, 3
      %p145 = pnand %p143, %p144
      %p146 = pneg %p145
      // Predicated region
      $region9: #{arcface_forward.1} parent=5 // pred_check
        _
      $region10: #{arcface_forward.1} parent=5 // pred_check_branch
        %148 = sbr.rel (%p145) target = $region12
      $region11: #{arcface_forward.1} parent=5 // pred_region
        %s149 = ssub.s32 %s20, 1
        // Predicated region
        $region13: #{arcface_forward.1} parent=11 // pred_check
          %p150 = pneg %p41
        $region14: #{arcface_forward.1} parent=11 // pred_check_branch
          %152 = sbr.rel (%p150) target = $region16
        $region15: #{arcface_forward.1} parent=11 // pred_region
          _
        $region16: #{arcface_forward.1} parent=11 // pred_fallthru
          _
        // Predicated region
        $region17: #{arcface_forward.1} parent=11 // pred_check
          %p153 = pneg %p88
        $region18: #{arcface_forward.1} parent=11 // pred_check_branch
          %155 = sbr.rel (%p153) target = $region20
        $region19: #{arcface_forward.1} parent=11 // pred_region
          _
        $region20: #{arcface_forward.1} parent=11 // pred_fallthru
          _
        // Predicated region
        $region21: #{arcface_forward.1} parent=11 // pred_check
          %p156 = pneg %p109
        $region22: #{arcface_forward.1} parent=11 // pred_check_branch
          %158 = sbr.rel (%p156) target = $region24
        $region23: #{arcface_forward.1} parent=11 // pred_region
          _
        $region24: #{arcface_forward.1} parent=11 // pred_fallthru
          _
      $region12: #{arcface_forward.1} parent=5 // pred_fallthru
        _
      %p159 = scmp.lt.s32.totalorder %s20, 2
      // Predicated region
      $region25: #{arcface_forward.1} parent=5 // pred_check
        %p160 = pneg %p159
      $region26: #{arcface_forward.1} parent=5 // pred_check_branch
        %162 = sbr.rel (%p160) target = $region28
      $region27: #{arcface_forward.1} parent=5 // pred_region
        // Predicated region
        $region29: #{arcface_forward.1} parent=27 // pred_check
          %p163 = pneg %p61
        $region30: #{arcface_forward.1} parent=27 // pred_check_branch
          %165 = sbr.rel (%p163) target = $region32
        $region31: #{arcface_forward.1} parent=27 // pred_region
          %s166 = sand.u32 %s51, 1
          %s167 = sand.u32 %s51, 1
          %s168 = smul.addr %s167, 1024
          %s169 = scalar_lea.vmem [#allocation4], %s168
          %s170 = smul.u32 4, %s20
          %s171 = smul.addr %s170, 4
          %s172 = scalar_lea.vmem %s2, %s171
          // Predicated region
          $region33: #{arcface_forward.1} parent=31 // pred_check
            _
          $region34: #{arcface_forward.1} parent=31 // pred_check_branch
            %174 = sbr.rel (0) target = $region36
          $region35: #{arcface_forward.1} parent=31 // pred_region
            // Predicated region
            $region37: #{arcface_forward.1} parent=35 // pred_check
              _
            $region38: #{arcface_forward.1} parent=35 // pred_check_branch
              %176 = sbr.rel (0) target = $region40
            $region39: #{arcface_forward.1} parent=35 // pred_region
              loop: start=0, step=1, limit=1
              $region41: #{arcface_forward.1} parent=39 // loop_pre_header
                _
              $region42: #{arcface_forward.1} parent=39 // loop_header
                %s178 = sphi 0, %s182
                %p179 = scmp.ge.s32.totalorder %s178, 1
                %s183 = sphi %s172, %s172
                %s184 = sphi %s169, %s169
              $region43: #{arcface_forward.1} parent=39 // loop_header_branch
                %181 = sbr.rel (%p179) target = $region47
              $region44: #{arcface_forward.1} parent=39 // loop_body
                %v185 = vld [vmem:[%s183] sm:$0xff]
                %186 = vst [vmem:[%s184] sm:$0xff] %v185
                %v187 = vld [vmem:[%s183 + $0x8] sm:$0xff]
                %188 = vst [vmem:[%s184 + $0x8] sm:$0xff] %v187
                %v189 = vld [vmem:[%s183 + $0x20] sm:$0xff]
                %190 = vst [vmem:[%s184 + $0x10] sm:$0xff] %v189
                %v191 = vld [vmem:[%s183 + $0x28] sm:$0xff]
                %192 = vst [vmem:[%s184 + $0x18] sm:$0xff] %v191
                %v193 = vld [vmem:[%s183 + $0x40] sm:$0xff]
                %194 = vst [vmem:[%s184 + $0x20] sm:$0xff] %v193
                %v195 = vld [vmem:[%s183 + $0x48] sm:$0xff]
                %196 = vst [vmem:[%s184 + $0x28] sm:$0xff] %v195
                %v197 = vld [vmem:[%s183 + $0x60] sm:$0xff]
                %198 = vst [vmem:[%s184 + $0x30] sm:$0xff] %v197
                %v199 = vld [vmem:[%s183 + $0x68] sm:$0xff]
                %200 = vst [vmem:[%s184 + $0x38] sm:$0xff] %v199
                %v201 = vld [vmem:[%s183 + $0x80] sm:$0xff]
                %202 = vst [vmem:[%s184 + $0x40] sm:$0xff] %v201
                %v203 = vld [vmem:[%s183 + $0x88] sm:$0xff]
                %204 = vst [vmem:[%s184 + $0x48] sm:$0xff] %v203
                %v205 = vld [vmem:[%s183 + $0xa0] sm:$0xff]
                %206 = vst [vmem:[%s184 + $0x50] sm:$0xff] %v205
                %v207 = vld [vmem:[%s183 + $0xa8] sm:$0xff]
                %208 = vst [vmem:[%s184 + $0x58] sm:$0xff] %v207
                %v209 = vld [vmem:[%s183 + $0xc0] sm:$0xff]
                %210 = vst [vmem:[%s184 + $0x60] sm:$0xff] %v209
                %v211 = vld [vmem:[%s183 + $0xc8] sm:$0xff]
                %212 = vst [vmem:[%s184 + $0x68] sm:$0xff] %v211
                %v213 = vld [vmem:[%s183 + $0xe0] sm:$0xff]
                %214 = vst [vmem:[%s184 + $0x70] sm:$0xff] %v213
                %v215 = vld [vmem:[%s183 + $0xe8] sm:$0xff]
                %216 = vst [vmem:[%s184 + $0x78] sm:$0xff] %v215
                %v217 = vld [vmem:[%s183 + $0x100] sm:$0xff]
                %218 = vst [vmem:[%s184 + $0x80] sm:$0xff] %v217
                %v219 = vld [vmem:[%s183 + $0x108] sm:$0xff]
                %220 = vst [vmem:[%s184 + $0x88] sm:$0xff] %v219
                %v221 = vld [vmem:[%s183 + $0x120] sm:$0xff]
                %222 = vst [vmem:[%s184 + $0x90] sm:$0xff] %v221
                %v223 = vld [vmem:[%s183 + $0x128] sm:$0xff]
                %224 = vst [vmem:[%s184 + $0x98] sm:$0xff] %v223
                %v225 = vld [vmem:[%s183 + $0x140] sm:$0xff]
                %226 = vst [vmem:[%s184 + $0xa0] sm:$0xff] %v225
                %v227 = vld [vmem:[%s183 + $0x148] sm:$0xff]
                %228 = vst [vmem:[%s184 + $0xa8] sm:$0xff] %v227
                %v229 = vld [vmem:[%s183 + $0x160] sm:$0xff]
                %230 = vst [vmem:[%s184 + $0xb0] sm:$0xff] %v229
                %v231 = vld [vmem:[%s183 + $0x168] sm:$0xff]
                %232 = vst [vmem:[%s184 + $0xb8] sm:$0xff] %v231
                %v233 = vld [vmem:[%s183 + $0x180] sm:$0xff]
                %234 = vst [vmem:[%s184 + $0xc0] sm:$0xff] %v233
                %v235 = vld [vmem:[%s183 + $0x188] sm:$0xff]
                %236 = vst [vmem:[%s184 + $0xc8] sm:$0xff] %v235
                %v237 = vld [vmem:[%s183 + $0x1a0] sm:$0xff]
                %238 = vst [vmem:[%s184 + $0xd0] sm:$0xff] %v237
                %v239 = vld [vmem:[%s183 + $0x1a8] sm:$0xff]
                %240 = vst [vmem:[%s184 + $0xd8] sm:$0xff] %v239
                %v241 = vld [vmem:[%s183 + $0x1c0] sm:$0xff]
                %242 = vst [vmem:[%s184 + $0xe0] sm:$0xff] %v241
                %v243 = vld [vmem:[%s183 + $0x1c8] sm:$0xff]
                %244 = vst [vmem:[%s184 + $0xe8] sm:$0xff] %v243
                %v245 = vld [vmem:[%s183 + $0x1e0] sm:$0xff]
                %246 = vst [vmem:[%s184 + $0xf0] sm:$0xff] %v245
                %v247 = vld [vmem:[%s183 + $0x1e8] sm:$0xff]
                %248 = vst [vmem:[%s184 + $0xf8] sm:$0xff] %v247
                %v249 = vld [vmem:[%s183 + $0x200] sm:$0xff]
                %250 = vst [vmem:[%s184 + $0x100] sm:$0xff] %v249
                %v251 = vld [vmem:[%s183 + $0x208] sm:$0xff]
                %252 = vst [vmem:[%s184 + $0x108] sm:$0xff] %v251
                %v253 = vld [vmem:[%s183 + $0x220] sm:$0xff]
                %254 = vst [vmem:[%s184 + $0x110] sm:$0xff] %v253
                %v255 = vld [vmem:[%s183 + $0x228] sm:$0xff]
                %256 = vst [vmem:[%s184 + $0x118] sm:$0xff] %v255
                %v257 = vld [vmem:[%s183 + $0x240] sm:$0xff]
                %258 = vst [vmem:[%s184 + $0x120] sm:$0xff] %v257
                %v259 = vld [vmem:[%s183 + $0x248] sm:$0xff]
                %260 = vst [vmem:[%s184 + $0x128] sm:$0xff] %v259
                %v261 = vld [vmem:[%s183 + $0x260] sm:$0xff]
                %262 = vst [vmem:[%s184 + $0x130] sm:$0xff] %v261
                %v263 = vld [vmem:[%s183 + $0x268] sm:$0xff]
                %264 = vst [vmem:[%s184 + $0x138] sm:$0xff] %v263
                %v265 = vld [vmem:[%s183 + $0x280] sm:$0xff]
                %266 = vst [vmem:[%s184 + $0x140] sm:$0xff] %v265
                %v267 = vld [vmem:[%s183 + $0x288] sm:$0xff]
                %268 = vst [vmem:[%s184 + $0x148] sm:$0xff] %v267
                %v269 = vld [vmem:[%s183 + $0x2a0] sm:$0xff]
                %270 = vst [vmem:[%s184 + $0x150] sm:$0xff] %v269
                %v271 = vld [vmem:[%s183 + $0x2a8] sm:$0xff]
                %272 = vst [vmem:[%s184 + $0x158] sm:$0xff] %v271
                %v273 = vld [vmem:[%s183 + $0x2c0] sm:$0xff]
                %274 = vst [vmem:[%s184 + $0x160] sm:$0xff] %v273
                %v275 = vld [vmem:[%s183 + $0x2c8] sm:$0xff]
                %276 = vst [vmem:[%s184 + $0x168] sm:$0xff] %v275
                %v277 = vld [vmem:[%s183 + $0x2e0] sm:$0xff]
                %278 = vst [vmem:[%s184 + $0x170] sm:$0xff] %v277
                %v279 = vld [vmem:[%s183 + $0x2e8] sm:$0xff]
                %280 = vst [vmem:[%s184 + $0x178] sm:$0xff] %v279
                %v281 = vld [vmem:[%s183 + $0x300] sm:$0xff]
                %282 = vst [vmem:[%s184 + $0x180] sm:$0xff] %v281
                %v283 = vld [vmem:[%s183 + $0x308] sm:$0xff]
                %284 = vst [vmem:[%s184 + $0x188] sm:$0xff] %v283
                %v285 = vld [vmem:[%s183 + $0x320] sm:$0xff]
                %286 = vst [vmem:[%s184 + $0x190] sm:$0xff] %v285
                %v287 = vld [vmem:[%s183 + $0x328] sm:$0xff]
                %288 = vst [vmem:[%s184 + $0x198] sm:$0xff] %v287
                %v289 = vld [vmem:[%s183 + $0x340] sm:$0xff]
                %290 = vst [vmem:[%s184 + $0x1a0] sm:$0xff] %v289
                %v291 = vld [vmem:[%s183 + $0x348] sm:$0xff]
                %292 = vst [vmem:[%s184 + $0x1a8] sm:$0xff] %v291
                %v293 = vld [vmem:[%s183 + $0x360] sm:$0xff]
                %294 = vst [vmem:[%s184 + $0x1b0] sm:$0xff] %v293
                %v295 = vld [vmem:[%s183 + $0x368] sm:$0xff]
                %296 = vst [vmem:[%s184 + $0x1b8] sm:$0xff] %v295
                %v297 = vld [vmem:[%s183 + $0x380] sm:$0xff]
                %298 = vst [vmem:[%s184 + $0x1c0] sm:$0xff] %v297
                %v299 = vld [vmem:[%s183 + $0x388] sm:$0xff]
                %300 = vst [vmem:[%s184 + $0x1c8] sm:$0xff] %v299
                %v301 = vld [vmem:[%s183 + $0x3a0] sm:$0xff]
                %302 = vst [vmem:[%s184 + $0x1d0] sm:$0xff] %v301
                %v303 = vld [vmem:[%s183 + $0x3a8] sm:$0xff]
                %304 = vst [vmem:[%s184 + $0x1d8] sm:$0xff] %v303
                %v305 = vld [vmem:[%s183 + $0x3c0] sm:$0xff]
                %306 = vst [vmem:[%s184 + $0x1e0] sm:$0xff] %v305
                %v307 = vld [vmem:[%s183 + $0x3c8] sm:$0xff]
                %308 = vst [vmem:[%s184 + $0x1e8] sm:$0xff] %v307
                %v309 = vld [vmem:[%s183 + $0x3e0] sm:$0xff]
                %310 = vst [vmem:[%s184 + $0x1f0] sm:$0xff] %v309
                %v311 = vld [vmem:[%s183 + $0x3e8] sm:$0xff]
                %312 = vst [vmem:[%s184 + $0x1f8] sm:$0xff] %v311
                %v313 = vld [vmem:[%s183 + $0x400] sm:$0xff]
                %314 = vst [vmem:[%s184 + $0x200] sm:$0xff] %v313
                %v315 = vld [vmem:[%s183 + $0x408] sm:$0xff]
                %316 = vst [vmem:[%s184 + $0x208] sm:$0xff] %v315
                %v317 = vld [vmem:[%s183 + $0x420] sm:$0xff]
                %318 = vst [vmem:[%s184 + $0x210] sm:$0xff] %v317
                %v319 = vld [vmem:[%s183 + $0x428] sm:$0xff]
                %320 = vst [vmem:[%s184 + $0x218] sm:$0xff] %v319
                %v321 = vld [vmem:[%s183 + $0x440] sm:$0xff]
                %322 = vst [vmem:[%s184 + $0x220] sm:$0xff] %v321
                %v323 = vld [vmem:[%s183 + $0x448] sm:$0xff]
                %324 = vst [vmem:[%s184 + $0x228] sm:$0xff] %v323
                %v325 = vld [vmem:[%s183 + $0x460] sm:$0xff]
                %326 = vst [vmem:[%s184 + $0x230] sm:$0xff] %v325
                %v327 = vld [vmem:[%s183 + $0x468] sm:$0xff]
                %328 = vst [vmem:[%s184 + $0x238] sm:$0xff] %v327
                %v329 = vld [vmem:[%s183 + $0x480] sm:$0xff]
                %330 = vst [vmem:[%s184 + $0x240] sm:$0xff] %v329
                %v331 = vld [vmem:[%s183 + $0x488] sm:$0xff]
                %332 = vst [vmem:[%s184 + $0x248] sm:$0xff] %v331
                %v333 = vld [vmem:[%s183 + $0x4a0] sm:$0xff]
                %334 = vst [vmem:[%s184 + $0x250] sm:$0xff] %v333
                %v335 = vld [vmem:[%s183 + $0x4a8] sm:$0xff]
                %336 = vst [vmem:[%s184 + $0x258] sm:$0xff] %v335
                %v337 = vld [vmem:[%s183 + $0x4c0] sm:$0xff]
                %338 = vst [vmem:[%s184 + $0x260] sm:$0xff] %v337
                %v339 = vld [vmem:[%s183 + $0x4c8] sm:$0xff]
                %340 = vst [vmem:[%s184 + $0x268] sm:$0xff] %v339
                %v341 = vld [vmem:[%s183 + $0x4e0] sm:$0xff]
                %342 = vst [vmem:[%s184 + $0x270] sm:$0xff] %v341
                %v343 = vld [vmem:[%s183 + $0x4e8] sm:$0xff]
                %344 = vst [vmem:[%s184 + $0x278] sm:$0xff] %v343
                %v345 = vld [vmem:[%s183 + $0x500] sm:$0xff]
                %346 = vst [vmem:[%s184 + $0x280] sm:$0xff] %v345
                %v347 = vld [vmem:[%s183 + $0x508] sm:$0xff]
                %348 = vst [vmem:[%s184 + $0x288] sm:$0xff] %v347
                %v349 = vld [vmem:[%s183 + $0x520] sm:$0xff]
                %350 = vst [vmem:[%s184 + $0x290] sm:$0xff] %v349
                %v351 = vld [vmem:[%s183 + $0x528] sm:$0xff]
                %352 = vst [vmem:[%s184 + $0x298] sm:$0xff] %v351
                %v353 = vld [vmem:[%s183 + $0x540] sm:$0xff]
                %354 = vst [vmem:[%s184 + $0x2a0] sm:$0xff] %v353
                %v355 = vld [vmem:[%s183 + $0x548] sm:$0xff]
                %356 = vst [vmem:[%s184 + $0x2a8] sm:$0xff] %v355
                %v357 = vld [vmem:[%s183 + $0x560] sm:$0xff]
                %358 = vst [vmem:[%s184 + $0x2b0] sm:$0xff] %v357
                %v359 = vld [vmem:[%s183 + $0x568] sm:$0xff]
                %360 = vst [vmem:[%s184 + $0x2b8] sm:$0xff] %v359
                %v361 = vld [vmem:[%s183 + $0x580] sm:$0xff]
                %362 = vst [vmem:[%s184 + $0x2c0] sm:$0xff] %v361
                %v363 = vld [vmem:[%s183 + $0x588] sm:$0xff]
                %364 = vst [vmem:[%s184 + $0x2c8] sm:$0xff] %v363
                %v365 = vld [vmem:[%s183 + $0x5a0] sm:$0xff]
                %366 = vst [vmem:[%s184 + $0x2d0] sm:$0xff] %v365
                %v367 = vld [vmem:[%s183 + $0x5a8] sm:$0xff]
                %368 = vst [vmem:[%s184 + $0x2d8] sm:$0xff] %v367
                %v369 = vld [vmem:[%s183 + $0x5c0] sm:$0xff]
                %370 = vst [vmem:[%s184 + $0x2e0] sm:$0xff] %v369
                %v371 = vld [vmem:[%s183 + $0x5c8] sm:$0xff]
                %372 = vst [vmem:[%s184 + $0x2e8] sm:$0xff] %v371
                %v373 = vld [vmem:[%s183 + $0x5e0] sm:$0xff]
                %374 = vst [vmem:[%s184 + $0x2f0] sm:$0xff] %v373
                %v375 = vld [vmem:[%s183 + $0x5e8] sm:$0xff]
                %376 = vst [vmem:[%s184 + $0x2f8] sm:$0xff] %v375
                %v377 = vld [vmem:[%s183 + $0x600] sm:$0xff]
                %378 = vst [vmem:[%s184 + $0x300] sm:$0xff] %v377
                %v379 = vld [vmem:[%s183 + $0x608] sm:$0xff]
                %380 = vst [vmem:[%s184 + $0x308] sm:$0xff] %v379
                %v381 = vld [vmem:[%s183 + $0x620] sm:$0xff]
                %382 = vst [vmem:[%s184 + $0x310] sm:$0xff] %v381
                %v383 = vld [vmem:[%s183 + $0x628] sm:$0xff]
                %384 = vst [vmem:[%s184 + $0x318] sm:$0xff] %v383
                %v385 = vld [vmem:[%s183 + $0x640] sm:$0xff]
                %386 = vst [vmem:[%s184 + $0x320] sm:$0xff] %v385
                %v387 = vld [vmem:[%s183 + $0x648] sm:$0xff]
                %388 = vst [vmem:[%s184 + $0x328] sm:$0xff] %v387
                %v389 = vld [vmem:[%s183 + $0x660] sm:$0xff]
                %390 = vst [vmem:[%s184 + $0x330] sm:$0xff] %v389
                %v391 = vld [vmem:[%s183 + $0x668] sm:$0xff]
                %392 = vst [vmem:[%s184 + $0x338] sm:$0xff] %v391
                %v393 = vld [vmem:[%s183 + $0x680] sm:$0xff]
                %394 = vst [vmem:[%s184 + $0x340] sm:$0xff] %v393
                %v395 = vld [vmem:[%s183 + $0x688] sm:$0xff]
                %396 = vst [vmem:[%s184 + $0x348] sm:$0xff] %v395
                %v397 = vld [vmem:[%s183 + $0x6a0] sm:$0xff]
                %398 = vst [vmem:[%s184 + $0x350] sm:$0xff] %v397
                %v399 = vld [vmem:[%s183 + $0x6a8] sm:$0xff]
                %400 = vst [vmem:[%s184 + $0x358] sm:$0xff] %v399
                %v401 = vld [vmem:[%s183 + $0x6c0] sm:$0xff]
                %402 = vst [vmem:[%s184 + $0x360] sm:$0xff] %v401
                %v403 = vld [vmem:[%s183 + $0x6c8] sm:$0xff]
                %404 = vst [vmem:[%s184 + $0x368] sm:$0xff] %v403
                %v405 = vld [vmem:[%s183 + $0x6e0] sm:$0xff]
                %406 = vst [vmem:[%s184 + $0x370] sm:$0xff] %v405
                %v407 = vld [vmem:[%s183 + $0x6e8] sm:$0xff]
                %408 = vst [vmem:[%s184 + $0x378] sm:$0xff] %v407
                %v409 = vld [vmem:[%s183 + $0x700] sm:$0xff]
                %410 = vst [vmem:[%s184 + $0x380] sm:$0xff] %v409
                %v411 = vld [vmem:[%s183 + $0x708] sm:$0xff]
                %412 = vst [vmem:[%s184 + $0x388] sm:$0xff] %v411
                %v413 = vld [vmem:[%s183 + $0x720] sm:$0xff]
                %414 = vst [vmem:[%s184 + $0x390] sm:$0xff] %v413
                %v415 = vld [vmem:[%s183 + $0x728] sm:$0xff]
                %416 = vst [vmem:[%s184 + $0x398] sm:$0xff] %v415
                %v417 = vld [vmem:[%s183 + $0x740] sm:$0xff]
                %418 = vst [vmem:[%s184 + $0x3a0] sm:$0xff] %v417
                %v419 = vld [vmem:[%s183 + $0x748] sm:$0xff]
                %420 = vst [vmem:[%s184 + $0x3a8] sm:$0xff] %v419
                %v421 = vld [vmem:[%s183 + $0x760] sm:$0xff]
                %422 = vst [vmem:[%s184 + $0x3b0] sm:$0xff] %v421
                %v423 = vld [vmem:[%s183 + $0x768] sm:$0xff]
                %424 = vst [vmem:[%s184 + $0x3b8] sm:$0xff] %v423
                %v425 = vld [vmem:[%s183 + $0x780] sm:$0xff]
                %426 = vst [vmem:[%s184 + $0x3c0] sm:$0xff] %v425
                %v427 = vld [vmem:[%s183 + $0x788] sm:$0xff]
                %428 = vst [vmem:[%s184 + $0x3c8] sm:$0xff] %v427
                %v429 = vld [vmem:[%s183 + $0x7a0] sm:$0xff]
                %430 = vst [vmem:[%s184 + $0x3d0] sm:$0xff] %v429
                %v431 = vld [vmem:[%s183 + $0x7a8] sm:$0xff]
                %432 = vst [vmem:[%s184 + $0x3d8] sm:$0xff] %v431
                %v433 = vld [vmem:[%s183 + $0x7c0] sm:$0xff]
                %434 = vst [vmem:[%s184 + $0x3e0] sm:$0xff] %v433
                %v435 = vld [vmem:[%s183 + $0x7c8] sm:$0xff]
                %436 = vst [vmem:[%s184 + $0x3e8] sm:$0xff] %v435
                %v437 = vld [vmem:[%s183 + $0x7e0] sm:$0xff]
                %438 = vst [vmem:[%s184 + $0x3f0] sm:$0xff] %v437
                %v439 = vld [vmem:[%s183 + $0x7e8] sm:$0xff]
                %440 = vst [vmem:[%s184 + $0x3f8] sm:$0xff] %v439
              $region45: #{arcface_forward.1} parent=39 // loop_footer
                %s182 = sadd.s32 1, %s178
              $region46: #{arcface_forward.1} parent=39 // loop_footer_branch
                %177 = sbr.rel target = $region42
              $region47: #{arcface_forward.1} parent=39 // loop_exit
                _
            $region40: #{arcface_forward.1} parent=35 // pred_fallthru
              _
            // Predicated region
            $region48: #{arcface_forward.1} parent=35 // pred_check
              _
            $region49: #{arcface_forward.1} parent=35 // pred_check_branch
              %442 = sbr.rel target = $region51
            $region50: #{arcface_forward.1} parent=35 // pred_region
              _
            $region51: #{arcface_forward.1} parent=35 // pred_fallthru
              _
          $region36: #{arcface_forward.1} parent=31 // pred_fallthru
            _
          %443 = vnop
        $region32: #{arcface_forward.1} parent=27 // pred_fallthru
          _
      $region28: #{arcface_forward.1} parent=5 // pred_fallthru
        _
      %p444 = scmp.le.s32.totalorder 1, %s20
      %p445 = scmp.lt.s32.totalorder %s20, 3
      %p446 = pnand %p444, %p445
      %p447 = pneg %p446
      // Predicated region
      $region52: #{arcface_forward.1} parent=5 // pred_check
        _
      $region53: #{arcface_forward.1} parent=5 // pred_check_branch
        %449 = sbr.rel (%p446) target = $region55
      $region54: #{arcface_forward.1} parent=5 // pred_region
        %s450 = ssub.s32 %s20, 1
        %s451 = sand.u32 %s54, 1
        %s452 = sand.u32 %s54, 1
        %s453 = smul.addr %s452, 1024
        %s454 = scalar_lea.vmem [#allocation4], %s453
        // Predicated region
        $region56: #{arcface_forward.1} parent=54 // pred_check
          %p455 = pneg %p67
        $region57: #{arcface_forward.1} parent=54 // pred_check_branch
          %457 = sbr.rel (%p455) target = $region59
        $region58: #{arcface_forward.1} parent=54 // pred_region
          _
        $region59: #{arcface_forward.1} parent=54 // pred_fallthru
          _
        %p458 = pneg %p41
        %p459 = pneg %p38
        %s460 = sand.u32 %s54, 1
        %s461 = sand.u32 %s54, 1
        %s462 = smul.addr %s461, 1024
        %s463 = scalar_lea.vmem [#allocation4], %s462
        %p464 = pneg %p67
        %p465 = pneg %p64
        %p466 = pneg %p88
        %p467 = pneg %p85
        %p468 = pneg %p109
        %p469 = pneg %p106
        %p470 = pneg %p135
        %p471 = pneg %p132
        %s472 = sand.u32 %s122, 1
        %s473 = scalar_lea.sflag [#allocation6], %s472
        %s474 = sand.u32 %s122, 1
        %s475 = smul.addr %s474, 32
        %s476 = scalar_lea.vmem [#allocation5], %s475
        %s477 = smul.u32 4, %s25
        %s478 = smul.u32 4, %s25
        %s479 = smul.u32 %s25, 512
        %s480 = sadd.s32 %s479, 512
        %v481 = vld [vmem:[%s454] sm:$0xff]
        %v482 = vld [vmem:[%s454 + $0x8] sm:$0xff]
        %v483 = vld [vmem:[%s454 + $0x10] sm:$0xff]
        %v484 = vld [vmem:[%s454 + $0x18] sm:$0xff]
        %v485 = vld [vmem:[%s454 + $0x20] sm:$0xff]
        %v486 = vld [vmem:[%s454 + $0x28] sm:$0xff]
        %v487 = vld [vmem:[%s454 + $0x30] sm:$0xff]
        %v488 = vld [vmem:[%s454 + $0x38] sm:$0xff]
        %v489 = vld [vmem:[%s454 + $0x40] sm:$0xff]
        %v490 = vld [vmem:[%s454 + $0x48] sm:$0xff]
        %v491 = vld [vmem:[%s454 + $0x50] sm:$0xff]
        %v492 = vld [vmem:[%s454 + $0x58] sm:$0xff]
        %v493 = vld [vmem:[%s454 + $0x60] sm:$0xff]
        %v494 = vld [vmem:[%s454 + $0x68] sm:$0xff]
        %v495 = vld [vmem:[%s454 + $0x70] sm:$0xff]
        %v496 = vld [vmem:[%s454 + $0x78] sm:$0xff]
        %v497 = vld [vmem:[%s454 + $0x80] sm:$0xff]
        %v498 = vld [vmem:[%s454 + $0x88] sm:$0xff]
        %v499 = vld [vmem:[%s454 + $0x90] sm:$0xff]
        %v500 = vld [vmem:[%s454 + $0x98] sm:$0xff]
        %v501 = vld [vmem:[%s454 + $0xa0] sm:$0xff]
        %v502 = vld [vmem:[%s454 + $0xa8] sm:$0xff]
        %v503 = vld [vmem:[%s454 + $0xb0] sm:$0xff]
        %v504 = vld [vmem:[%s454 + $0xb8] sm:$0xff]
        %v505 = vld [vmem:[%s454 + $0xc0] sm:$0xff]
        %v506 = vld [vmem:[%s454 + $0xc8] sm:$0xff]
        %v507 = vld [vmem:[%s454 + $0xd0] sm:$0xff]
        %v508 = vld [vmem:[%s454 + $0xd8] sm:$0xff]
        %v509 = vld [vmem:[%s454 + $0xe0] sm:$0xff]
        %v510 = vld [vmem:[%s454 + $0xe8] sm:$0xff]
        %v511 = vld [vmem:[%s454 + $0xf0] sm:$0xff]
        %v512 = vld [vmem:[%s454 + $0xf8] sm:$0xff]
        %v513 = vld [vmem:[%s454 + $0x100] sm:$0xff]
        %v514 = vld [vmem:[%s454 + $0x108] sm:$0xff]
        %v515 = vld [vmem:[%s454 + $0x110] sm:$0xff]
        %v516 = vld [vmem:[%s454 + $0x118] sm:$0xff]
        %v517 = vld [vmem:[%s454 + $0x120] sm:$0xff]
        %v518 = vld [vmem:[%s454 + $0x128] sm:$0xff]
        %v519 = vld [vmem:[%s454 + $0x130] sm:$0xff]
        %v520 = vld [vmem:[%s454 + $0x138] sm:$0xff]
        %v521 = vld [vmem:[%s454 + $0x140] sm:$0xff]
        %v522 = vld [vmem:[%s454 + $0x148] sm:$0xff]
        %v523 = vld [vmem:[%s454 + $0x150] sm:$0xff]
        %v524 = vld [vmem:[%s454 + $0x158] sm:$0xff]
        %v525 = vld [vmem:[%s454 + $0x160] sm:$0xff]
        %v526 = vld [vmem:[%s454 + $0x168] sm:$0xff]
        %v527 = vld [vmem:[%s454 + $0x170] sm:$0xff]
        %v528 = vld [vmem:[%s454 + $0x178] sm:$0xff]
        %v529 = vld [vmem:[%s454 + $0x180] sm:$0xff]
        %v530 = vld [vmem:[%s454 + $0x188] sm:$0xff]
        %v531 = vld [vmem:[%s454 + $0x190] sm:$0xff]
        %v532 = vld [vmem:[%s454 + $0x198] sm:$0xff]
        %v533 = vld [vmem:[%s454 + $0x1a0] sm:$0xff]
        %v534 = vld [vmem:[%s454 + $0x1a8] sm:$0xff]
        %v535 = vld [vmem:[%s454 + $0x1b0] sm:$0xff]
        %v536 = vld [vmem:[%s454 + $0x1b8] sm:$0xff]
        %v537 = vld [vmem:[%s454 + $0x1c0] sm:$0xff]
        %v538 = vld [vmem:[%s454 + $0x1c8] sm:$0xff]
        %v539 = vld [vmem:[%s454 + $0x1d0] sm:$0xff]
        %v540 = vld [vmem:[%s454 + $0x1d8] sm:$0xff]
        %v541 = vld [vmem:[%s454 + $0x1e0] sm:$0xff]
        %v542 = vld [vmem:[%s454 + $0x1e8] sm:$0xff]
        %v543 = vld [vmem:[%s454 + $0x1f0] sm:$0xff]
        %v544 = vld [vmem:[%s454 + $0x1f8] sm:$0xff]
        %v545 = vld [vmem:[%s454 + $0x200] sm:$0xff]
        %v546 = vld [vmem:[%s454 + $0x208] sm:$0xff]
        %v547 = vld [vmem:[%s454 + $0x210] sm:$0xff]
        %v548 = vld [vmem:[%s454 + $0x218] sm:$0xff]
        %v549 = vld [vmem:[%s454 + $0x220] sm:$0xff]
        %v550 = vld [vmem:[%s454 + $0x228] sm:$0xff]
        %v551 = vld [vmem:[%s454 + $0x230] sm:$0xff]
        %v552 = vld [vmem:[%s454 + $0x238] sm:$0xff]
        %v553 = vld [vmem:[%s454 + $0x240] sm:$0xff]
        %v554 = vld [vmem:[%s454 + $0x248] sm:$0xff]
        %v555 = vld [vmem:[%s454 + $0x250] sm:$0xff]
        %v556 = vld [vmem:[%s454 + $0x258] sm:$0xff]
        %v557 = vld [vmem:[%s454 + $0x260] sm:$0xff]
        %v558 = vld [vmem:[%s454 + $0x268] sm:$0xff]
        %v559 = vld [vmem:[%s454 + $0x270] sm:$0xff]
        %v560 = vld [vmem:[%s454 + $0x278] sm:$0xff]
        %v561 = vld [vmem:[%s454 + $0x280] sm:$0xff]
        %v562 = vld [vmem:[%s454 + $0x288] sm:$0xff]
        %v563 = vld [vmem:[%s454 + $0x290] sm:$0xff]
        %v564 = vld [vmem:[%s454 + $0x298] sm:$0xff]
        %v565 = vld [vmem:[%s454 + $0x2a0] sm:$0xff]
        %v566 = vld [vmem:[%s454 + $0x2a8] sm:$0xff]
        %v567 = vld [vmem:[%s454 + $0x2b0] sm:$0xff]
        %v568 = vld [vmem:[%s454 + $0x2b8] sm:$0xff]
        %v569 = vld [vmem:[%s454 + $0x2c0] sm:$0xff]
        %v570 = vld [vmem:[%s454 + $0x2c8] sm:$0xff]
        %v571 = vld [vmem:[%s454 + $0x2d0] sm:$0xff]
        %v572 = vld [vmem:[%s454 + $0x2d8] sm:$0xff]
        %v573 = vld [vmem:[%s454 + $0x2e0] sm:$0xff]
        %v574 = vld [vmem:[%s454 + $0x2e8] sm:$0xff]
        %v575 = vld [vmem:[%s454 + $0x2f0] sm:$0xff]
        %v576 = vld [vmem:[%s454 + $0x2f8] sm:$0xff]
        %v577 = vld [vmem:[%s454 + $0x300] sm:$0xff]
        %v578 = vld [vmem:[%s454 + $0x308] sm:$0xff]
        %v579 = vld [vmem:[%s454 + $0x310] sm:$0xff]
        %v580 = vld [vmem:[%s454 + $0x318] sm:$0xff]
        %v581 = vld [vmem:[%s454 + $0x320] sm:$0xff]
        %v582 = vld [vmem:[%s454 + $0x328] sm:$0xff]
        %v583 = vld [vmem:[%s454 + $0x330] sm:$0xff]
        %v584 = vld [vmem:[%s454 + $0x338] sm:$0xff]
        %v585 = vld [vmem:[%s454 + $0x340] sm:$0xff]
        %v586 = vld [vmem:[%s454 + $0x348] sm:$0xff]
        %v587 = vld [vmem:[%s454 + $0x350] sm:$0xff]
        %v588 = vld [vmem:[%s454 + $0x358] sm:$0xff]
        %v589 = vld [vmem:[%s454 + $0x360] sm:$0xff]
        %v590 = vld [vmem:[%s454 + $0x368] sm:$0xff]
        %v591 = vld [vmem:[%s454 + $0x370] sm:$0xff]
        %v592 = vld [vmem:[%s454 + $0x378] sm:$0xff]
        %v593 = vld [vmem:[%s454 + $0x380] sm:$0xff]
        %v594 = vld [vmem:[%s454 + $0x388] sm:$0xff]
        %v595 = vld [vmem:[%s454 + $0x390] sm:$0xff]
        %v596 = vld [vmem:[%s454 + $0x398] sm:$0xff]
        %v597 = vld [vmem:[%s454 + $0x3a0] sm:$0xff]
        %v598 = vld [vmem:[%s454 + $0x3a8] sm:$0xff]
        %v599 = vld [vmem:[%s454 + $0x3b0] sm:$0xff]
        %v600 = vld [vmem:[%s454 + $0x3b8] sm:$0xff]
        %v601 = vld [vmem:[%s454 + $0x3c0] sm:$0xff]
        %v602 = vld [vmem:[%s454 + $0x3c8] sm:$0xff]
        %v603 = vld [vmem:[%s454 + $0x3d0] sm:$0xff]
        %v604 = vld [vmem:[%s454 + $0x3d8] sm:$0xff]
        %v605 = vld [vmem:[%s454 + $0x3e0] sm:$0xff]
        %v606 = vld [vmem:[%s454 + $0x3e8] sm:$0xff]
        %v607 = vld [vmem:[%s454 + $0x3f0] sm:$0xff]
        %v608 = vld [vmem:[%s454 + $0x3f8] sm:$0xff]
        %v609 = vunpack.c.l.bf16 %v481
        %v610 = vunpack.c.h.bf16 %v481
        %v611 = vunpack.c.l.bf16 %v482
        %v612 = vunpack.c.h.bf16 %v482
        %v613 = vunpack.c.l.bf16 %v483
        %v614 = vunpack.c.h.bf16 %v483
        %v615 = vunpack.c.l.bf16 %v484
        %v616 = vunpack.c.h.bf16 %v484
        %v617 = vunpack.c.l.bf16 %v485
        %v618 = vunpack.c.h.bf16 %v485
        %v619 = vunpack.c.l.bf16 %v486
        %v620 = vunpack.c.h.bf16 %v486
        %v621 = vunpack.c.l.bf16 %v487
        %v622 = vunpack.c.h.bf16 %v487
        %v623 = vunpack.c.l.bf16 %v488
        %v624 = vunpack.c.h.bf16 %v488
        %v625 = vunpack.c.l.bf16 %v489
        %v626 = vunpack.c.h.bf16 %v489
        %v627 = vunpack.c.l.bf16 %v490
        %v628 = vunpack.c.h.bf16 %v490
        %v629 = vunpack.c.l.bf16 %v491
        %v630 = vunpack.c.h.bf16 %v491
        %v631 = vunpack.c.l.bf16 %v492
        %v632 = vunpack.c.h.bf16 %v492
        %v633 = vunpack.c.l.bf16 %v493
        %v634 = vunpack.c.h.bf16 %v493
        %v635 = vunpack.c.l.bf16 %v494
        %v636 = vunpack.c.h.bf16 %v494
        %v637 = vunpack.c.l.bf16 %v495
        %v638 = vunpack.c.h.bf16 %v495
        %v639 = vunpack.c.l.bf16 %v496
        %v640 = vunpack.c.h.bf16 %v496
        %v641 = vunpack.c.l.bf16 %v497
        %v642 = vunpack.c.h.bf16 %v497
        %v643 = vunpack.c.l.bf16 %v498
        %v644 = vunpack.c.h.bf16 %v498
        %v645 = vunpack.c.l.bf16 %v499
        %v646 = vunpack.c.h.bf16 %v499
        %v647 = vunpack.c.l.bf16 %v500
        %v648 = vunpack.c.h.bf16 %v500
        %v649 = vunpack.c.l.bf16 %v501
        %v650 = vunpack.c.h.bf16 %v501
        %v651 = vunpack.c.l.bf16 %v502
        %v652 = vunpack.c.h.bf16 %v502
        %v653 = vunpack.c.l.bf16 %v503
        %v654 = vunpack.c.h.bf16 %v503
        %v655 = vunpack.c.l.bf16 %v504
        %v656 = vunpack.c.h.bf16 %v504
        %v657 = vunpack.c.l.bf16 %v505
        %v658 = vunpack.c.h.bf16 %v505
        %v659 = vunpack.c.l.bf16 %v506
        %v660 = vunpack.c.h.bf16 %v506
        %v661 = vunpack.c.l.bf16 %v507
        %v662 = vunpack.c.h.bf16 %v507
        %v663 = vunpack.c.l.bf16 %v508
        %v664 = vunpack.c.h.bf16 %v508
        %v665 = vunpack.c.l.bf16 %v509
        %v666 = vunpack.c.h.bf16 %v509
        %v667 = vunpack.c.l.bf16 %v510
        %v668 = vunpack.c.h.bf16 %v510
        %v669 = vunpack.c.l.bf16 %v511
        %v670 = vunpack.c.h.bf16 %v511
        %v671 = vunpack.c.l.bf16 %v512
        %v672 = vunpack.c.h.bf16 %v512
        %v673 = vunpack.c.l.bf16 %v513
        %v674 = vunpack.c.h.bf16 %v513
        %v675 = vunpack.c.l.bf16 %v514
        %v676 = vunpack.c.h.bf16 %v514
        %v677 = vunpack.c.l.bf16 %v515
        %v678 = vunpack.c.h.bf16 %v515
        %v679 = vunpack.c.l.bf16 %v516
        %v680 = vunpack.c.h.bf16 %v516
        %v681 = vunpack.c.l.bf16 %v517
        %v682 = vunpack.c.h.bf16 %v517
        %v683 = vunpack.c.l.bf16 %v518
        %v684 = vunpack.c.h.bf16 %v518
        %v685 = vunpack.c.l.bf16 %v519
        %v686 = vunpack.c.h.bf16 %v519
        %v687 = vunpack.c.l.bf16 %v520
        %v688 = vunpack.c.h.bf16 %v520
        %v689 = vunpack.c.l.bf16 %v521
        %v690 = vunpack.c.h.bf16 %v521
        %v691 = vunpack.c.l.bf16 %v522
        %v692 = vunpack.c.h.bf16 %v522
        %v693 = vunpack.c.l.bf16 %v523
        %v694 = vunpack.c.h.bf16 %v523
        %v695 = vunpack.c.l.bf16 %v524
        %v696 = vunpack.c.h.bf16 %v524
        %v697 = vunpack.c.l.bf16 %v525
        %v698 = vunpack.c.h.bf16 %v525
        %v699 = vunpack.c.l.bf16 %v526
        %v700 = vunpack.c.h.bf16 %v526
        %v701 = vunpack.c.l.bf16 %v527
        %v702 = vunpack.c.h.bf16 %v527
        %v703 = vunpack.c.l.bf16 %v528
        %v704 = vunpack.c.h.bf16 %v528
        %v705 = vunpack.c.l.bf16 %v529
        %v706 = vunpack.c.h.bf16 %v529
        %v707 = vunpack.c.l.bf16 %v530
        %v708 = vunpack.c.h.bf16 %v530
        %v709 = vunpack.c.l.bf16 %v531
        %v710 = vunpack.c.h.bf16 %v531
        %v711 = vunpack.c.l.bf16 %v532
        %v712 = vunpack.c.h.bf16 %v532
        %v713 = vunpack.c.l.bf16 %v533
        %v714 = vunpack.c.h.bf16 %v533
        %v715 = vunpack.c.l.bf16 %v534
        %v716 = vunpack.c.h.bf16 %v534
        %v717 = vunpack.c.l.bf16 %v535
        %v718 = vunpack.c.h.bf16 %v535
        %v719 = vunpack.c.l.bf16 %v536
        %v720 = vunpack.c.h.bf16 %v536
        %v721 = vunpack.c.l.bf16 %v537
        %v722 = vunpack.c.h.bf16 %v537
        %v723 = vunpack.c.l.bf16 %v538
        %v724 = vunpack.c.h.bf16 %v538
        %v725 = vunpack.c.l.bf16 %v539
        %v726 = vunpack.c.h.bf16 %v539
        %v727 = vunpack.c.l.bf16 %v540
        %v728 = vunpack.c.h.bf16 %v540
        %v729 = vunpack.c.l.bf16 %v541
        %v730 = vunpack.c.h.bf16 %v541
        %v731 = vunpack.c.l.bf16 %v542
        %v732 = vunpack.c.h.bf16 %v542
        %v733 = vunpack.c.l.bf16 %v543
        %v734 = vunpack.c.h.bf16 %v543
        %v735 = vunpack.c.l.bf16 %v544
        %v736 = vunpack.c.h.bf16 %v544
        %v737 = vunpack.c.l.bf16 %v545
        %v738 = vunpack.c.h.bf16 %v545
        %v739 = vunpack.c.l.bf16 %v546
        %v740 = vunpack.c.h.bf16 %v546
        %v741 = vunpack.c.l.bf16 %v547
        %v742 = vunpack.c.h.bf16 %v547
        %v743 = vunpack.c.l.bf16 %v548
        %v744 = vunpack.c.h.bf16 %v548
        %v745 = vunpack.c.l.bf16 %v549
        %v746 = vunpack.c.h.bf16 %v549
        %v747 = vunpack.c.l.bf16 %v550
        %v748 = vunpack.c.h.bf16 %v550
        %v749 = vunpack.c.l.bf16 %v551
        %v750 = vunpack.c.h.bf16 %v551
        %v751 = vunpack.c.l.bf16 %v552
        %v752 = vunpack.c.h.bf16 %v552
        %v753 = vunpack.c.l.bf16 %v553
        %v754 = vunpack.c.h.bf16 %v553
        %v755 = vunpack.c.l.bf16 %v554
        %v756 = vunpack.c.h.bf16 %v554
        %v757 = vunpack.c.l.bf16 %v555
        %v758 = vunpack.c.h.bf16 %v555
        %v759 = vunpack.c.l.bf16 %v556
        %v760 = vunpack.c.h.bf16 %v556
        %v761 = vunpack.c.l.bf16 %v557
        %v762 = vunpack.c.h.bf16 %v557
        %v763 = vunpack.c.l.bf16 %v558
        %v764 = vunpack.c.h.bf16 %v558
        %v765 = vunpack.c.l.bf16 %v559
        %v766 = vunpack.c.h.bf16 %v559
        %v767 = vunpack.c.l.bf16 %v560
        %v768 = vunpack.c.h.bf16 %v560
        %v769 = vunpack.c.l.bf16 %v561
        %v770 = vunpack.c.h.bf16 %v561
        %v771 = vunpack.c.l.bf16 %v562
        %v772 = vunpack.c.h.bf16 %v562
        %v773 = vunpack.c.l.bf16 %v563
        %v774 = vunpack.c.h.bf16 %v563
        %v775 = vunpack.c.l.bf16 %v564
        %v776 = vunpack.c.h.bf16 %v564
        %v777 = vunpack.c.l.bf16 %v565
        %v778 = vunpack.c.h.bf16 %v565
        %v779 = vunpack.c.l.bf16 %v566
        %v780 = vunpack.c.h.bf16 %v566
        %v781 = vunpack.c.l.bf16 %v567
        %v782 = vunpack.c.h.bf16 %v567
        %v783 = vunpack.c.l.bf16 %v568
        %v784 = vunpack.c.h.bf16 %v568
        %v785 = vunpack.c.l.bf16 %v569
        %v786 = vunpack.c.h.bf16 %v569
        %v787 = vunpack.c.l.bf16 %v570
        %v788 = vunpack.c.h.bf16 %v570
        %v789 = vunpack.c.l.bf16 %v571
        %v790 = vunpack.c.h.bf16 %v571
        %v791 = vunpack.c.l.bf16 %v572
        %v792 = vunpack.c.h.bf16 %v572
        %v793 = vunpack.c.l.bf16 %v573
        %v794 = vunpack.c.h.bf16 %v573
        %v795 = vunpack.c.l.bf16 %v574
        %v796 = vunpack.c.h.bf16 %v574
        %v797 = vunpack.c.l.bf16 %v575
        %v798 = vunpack.c.h.bf16 %v575
        %v799 = vunpack.c.l.bf16 %v576
        %v800 = vunpack.c.h.bf16 %v576
        %v801 = vunpack.c.l.bf16 %v577
        %v802 = vunpack.c.h.bf16 %v577
        %v803 = vunpack.c.l.bf16 %v578
        %v804 = vunpack.c.h.bf16 %v578
        %v805 = vunpack.c.l.bf16 %v579
        %v806 = vunpack.c.h.bf16 %v579
        %v807 = vunpack.c.l.bf16 %v580
        %v808 = vunpack.c.h.bf16 %v580
        %v809 = vunpack.c.l.bf16 %v581
        %v810 = vunpack.c.h.bf16 %v581
        %v811 = vunpack.c.l.bf16 %v582
        %v812 = vunpack.c.h.bf16 %v582
        %v813 = vunpack.c.l.bf16 %v583
        %v814 = vunpack.c.h.bf16 %v583
        %v815 = vunpack.c.l.bf16 %v584
        %v816 = vunpack.c.h.bf16 %v584
        %v817 = vunpack.c.l.bf16 %v585
        %v818 = vunpack.c.h.bf16 %v585
        %v819 = vunpack.c.l.bf16 %v586
        %v820 = vunpack.c.h.bf16 %v586
        %v821 = vunpack.c.l.bf16 %v587
        %v822 = vunpack.c.h.bf16 %v587
        %v823 = vunpack.c.l.bf16 %v588
        %v824 = vunpack.c.h.bf16 %v588
        %v825 = vunpack.c.l.bf16 %v589
        %v826 = vunpack.c.h.bf16 %v589
        %v827 = vunpack.c.l.bf16 %v590
        %v828 = vunpack.c.h.bf16 %v590
        %v829 = vunpack.c.l.bf16 %v591
        %v830 = vunpack.c.h.bf16 %v591
        %v831 = vunpack.c.l.bf16 %v592
        %v832 = vunpack.c.h.bf16 %v592
        %v833 = vunpack.c.l.bf16 %v593
        %v834 = vunpack.c.h.bf16 %v593
        %v835 = vunpack.c.l.bf16 %v594
        %v836 = vunpack.c.h.bf16 %v594
        %v837 = vunpack.c.l.bf16 %v595
        %v838 = vunpack.c.h.bf16 %v595
        %v839 = vunpack.c.l.bf16 %v596
        %v840 = vunpack.c.h.bf16 %v596
        %v841 = vunpack.c.l.bf16 %v597
        %v842 = vunpack.c.h.bf16 %v597
        %v843 = vunpack.c.l.bf16 %v598
        %v844 = vunpack.c.h.bf16 %v598
        %v845 = vunpack.c.l.bf16 %v599
        %v846 = vunpack.c.h.bf16 %v599
        %v847 = vunpack.c.l.bf16 %v600
        %v848 = vunpack.c.h.bf16 %v600
        %v849 = vunpack.c.l.bf16 %v601
        %v850 = vunpack.c.h.bf16 %v601
        %v851 = vunpack.c.l.bf16 %v602
        %v852 = vunpack.c.h.bf16 %v602
        %v853 = vunpack.c.l.bf16 %v603
        %v854 = vunpack.c.h.bf16 %v603
        %v855 = vunpack.c.l.bf16 %v604
        %v856 = vunpack.c.h.bf16 %v604
        %v857 = vunpack.c.l.bf16 %v605
        %v858 = vunpack.c.h.bf16 %v605
        %v859 = vunpack.c.l.bf16 %v606
        %v860 = vunpack.c.h.bf16 %v606
        %v861 = vunpack.c.l.bf16 %v607
        %v862 = vunpack.c.h.bf16 %v607
        %v863 = vunpack.c.l.bf16 %v608
        %v864 = vunpack.c.h.bf16 %v608
        %v865 = vmul.f32 %v609, %v609
        %v866 = vmul.f32 %v610, %v610
        %v867 = vmul.f32 %v611, %v611
        %v868 = vmul.f32 %v612, %v612
        %v869 = vmul.f32 %v613, %v613
        %v870 = vmul.f32 %v614, %v614
        %v871 = vmul.f32 %v615, %v615
        %v872 = vmul.f32 %v616, %v616
        %v873 = vmul.f32 %v617, %v617
        %v874 = vmul.f32 %v618, %v618
        %v875 = vmul.f32 %v619, %v619
        %v876 = vmul.f32 %v620, %v620
        %v877 = vmul.f32 %v621, %v621
        %v878 = vmul.f32 %v622, %v622
        %v879 = vmul.f32 %v623, %v623
        %v880 = vmul.f32 %v624, %v624
        %v881 = vmul.f32 %v625, %v625
        %v882 = vmul.f32 %v626, %v626
        %v883 = vmul.f32 %v627, %v627
        %v884 = vmul.f32 %v628, %v628
        %v885 = vmul.f32 %v629, %v629
        %v886 = vmul.f32 %v630, %v630
        %v887 = vmul.f32 %v631, %v631
        %v888 = vmul.f32 %v632, %v632
        %v889 = vmul.f32 %v633, %v633
        %v890 = vmul.f32 %v634, %v634
        %v891 = vmul.f32 %v635, %v635
        %v892 = vmul.f32 %v636, %v636
        %v893 = vmul.f32 %v637, %v637
        %v894 = vmul.f32 %v638, %v638
        %v895 = vmul.f32 %v639, %v639
        %v896 = vmul.f32 %v640, %v640
        %v897 = vmul.f32 %v641, %v641
        %v898 = vmul.f32 %v642, %v642
        %v899 = vmul.f32 %v643, %v643
        %v900 = vmul.f32 %v644, %v644
        %v901 = vmul.f32 %v645, %v645
        %v902 = vmul.f32 %v646, %v646
        %v903 = vmul.f32 %v647, %v647
        %v904 = vmul.f32 %v648, %v648
        %v905 = vmul.f32 %v649, %v649
        %v906 = vmul.f32 %v650, %v650
        %v907 = vmul.f32 %v651, %v651
        %v908 = vmul.f32 %v652, %v652
        %v909 = vmul.f32 %v653, %v653
        %v910 = vmul.f32 %v654, %v654
        %v911 = vmul.f32 %v655, %v655
        %v912 = vmul.f32 %v656, %v656
        %v913 = vmul.f32 %v657, %v657
        %v914 = vmul.f32 %v658, %v658
        %v915 = vmul.f32 %v659, %v659
        %v916 = vmul.f32 %v660, %v660
        %v917 = vmul.f32 %v661, %v661
        %v918 = vmul.f32 %v662, %v662
        %v919 = vmul.f32 %v663, %v663
        %v920 = vmul.f32 %v664, %v664
        %v921 = vmul.f32 %v665, %v665
        %v922 = vmul.f32 %v666, %v666
        %v923 = vmul.f32 %v667, %v667
        %v924 = vmul.f32 %v668, %v668
        %v925 = vmul.f32 %v669, %v669
        %v926 = vmul.f32 %v670, %v670
        %v927 = vmul.f32 %v671, %v671
        %v928 = vmul.f32 %v672, %v672
        %v929 = vmul.f32 %v673, %v673
        %v930 = vmul.f32 %v674, %v674
        %v931 = vmul.f32 %v675, %v675
        %v932 = vmul.f32 %v676, %v676
        %v933 = vmul.f32 %v677, %v677
        %v934 = vmul.f32 %v678, %v678
        %v935 = vmul.f32 %v679, %v679
        %v936 = vmul.f32 %v680, %v680
        %v937 = vmul.f32 %v681, %v681
        %v938 = vmul.f32 %v682, %v682
        %v939 = vmul.f32 %v683, %v683
        %v940 = vmul.f32 %v684, %v684
        %v941 = vmul.f32 %v685, %v685
        %v942 = vmul.f32 %v686, %v686
        %v943 = vmul.f32 %v687, %v687
        %v944 = vmul.f32 %v688, %v688
        %v945 = vmul.f32 %v689, %v689
        %v946 = vmul.f32 %v690, %v690
        %v947 = vmul.f32 %v691, %v691
        %v948 = vmul.f32 %v692, %v692
        %v949 = vmul.f32 %v693, %v693
        %v950 = vmul.f32 %v694, %v694
        %v951 = vmul.f32 %v695, %v695
        %v952 = vmul.f32 %v696, %v696
        %v953 = vmul.f32 %v697, %v697
        %v954 = vmul.f32 %v698, %v698
        %v955 = vmul.f32 %v699, %v699
        %v956 = vmul.f32 %v700, %v700
        %v957 = vmul.f32 %v701, %v701
        %v958 = vmul.f32 %v702, %v702
        %v959 = vmul.f32 %v703, %v703
        %v960 = vmul.f32 %v704, %v704
        %v961 = vmul.f32 %v705, %v705
        %v962 = vmul.f32 %v706, %v706
        %v963 = vmul.f32 %v707, %v707
        %v964 = vmul.f32 %v708, %v708
        %v965 = vmul.f32 %v709, %v709
        %v966 = vmul.f32 %v710, %v710
        %v967 = vmul.f32 %v711, %v711
        %v968 = vmul.f32 %v712, %v712
        %v969 = vmul.f32 %v713, %v713
        %v970 = vmul.f32 %v714, %v714
        %v971 = vmul.f32 %v715, %v715
        %v972 = vmul.f32 %v716, %v716
        %v973 = vmul.f32 %v717, %v717
        %v974 = vmul.f32 %v718, %v718
        %v975 = vmul.f32 %v719, %v719
        %v976 = vmul.f32 %v720, %v720
        %v977 = vmul.f32 %v721, %v721
        %v978 = vmul.f32 %v722, %v722
        %v979 = vmul.f32 %v723, %v723
        %v980 = vmul.f32 %v724, %v724
        %v981 = vmul.f32 %v725, %v725
        %v982 = vmul.f32 %v726, %v726
        %v983 = vmul.f32 %v727, %v727
        %v984 = vmul.f32 %v728, %v728
        %v985 = vmul.f32 %v729, %v729
        %v986 = vmul.f32 %v730, %v730
        %v987 = vmul.f32 %v731, %v731
        %v988 = vmul.f32 %v732, %v732
        %v989 = vmul.f32 %v733, %v733
        %v990 = vmul.f32 %v734, %v734
        %v991 = vmul.f32 %v735, %v735
        %v992 = vmul.f32 %v736, %v736
        %v993 = vmul.f32 %v737, %v737
        %v994 = vmul.f32 %v738, %v738
        %v995 = vmul.f32 %v739, %v739
        %v996 = vmul.f32 %v740, %v740
        %v997 = vmul.f32 %v741, %v741
        %v998 = vmul.f32 %v742, %v742
        %v999 = vmul.f32 %v743, %v743
        %v1000 = vmul.f32 %v744, %v744
        %v1001 = vmul.f32 %v745, %v745
        %v1002 = vmul.f32 %v746, %v746
        %v1003 = vmul.f32 %v747, %v747
        %v1004 = vmul.f32 %v748, %v748
        %v1005 = vmul.f32 %v749, %v749
        %v1006 = vmul.f32 %v750, %v750
        %v1007 = vmul.f32 %v751, %v751
        %v1008 = vmul.f32 %v752, %v752
        %v1009 = vmul.f32 %v753, %v753
        %v1010 = vmul.f32 %v754, %v754
        %v1011 = vmul.f32 %v755, %v755
        %v1012 = vmul.f32 %v756, %v756
        %v1013 = vmul.f32 %v757, %v757
        %v1014 = vmul.f32 %v758, %v758
        %v1015 = vmul.f32 %v759, %v759
        %v1016 = vmul.f32 %v760, %v760
        %v1017 = vmul.f32 %v761, %v761
        %v1018 = vmul.f32 %v762, %v762
        %v1019 = vmul.f32 %v763, %v763
        %v1020 = vmul.f32 %v764, %v764
        %v1021 = vmul.f32 %v765, %v765
        %v1022 = vmul.f32 %v766, %v766
        %v1023 = vmul.f32 %v767, %v767
        %v1024 = vmul.f32 %v768, %v768
        %v1025 = vmul.f32 %v769, %v769
        %v1026 = vmul.f32 %v770, %v770
        %v1027 = vmul.f32 %v771, %v771
        %v1028 = vmul.f32 %v772, %v772
        %v1029 = vmul.f32 %v773, %v773
        %v1030 = vmul.f32 %v774, %v774
        %v1031 = vmul.f32 %v775, %v775
        %v1032 = vmul.f32 %v776, %v776
        %v1033 = vmul.f32 %v777, %v777
        %v1034 = vmul.f32 %v778, %v778
        %v1035 = vmul.f32 %v779, %v779
        %v1036 = vmul.f32 %v780, %v780
        %v1037 = vmul.f32 %v781, %v781
        %v1038 = vmul.f32 %v782, %v782
        %v1039 = vmul.f32 %v783, %v783
        %v1040 = vmul.f32 %v784, %v784
        %v1041 = vmul.f32 %v785, %v785
        %v1042 = vmul.f32 %v786, %v786
        %v1043 = vmul.f32 %v787, %v787
        %v1044 = vmul.f32 %v788, %v788
        %v1045 = vmul.f32 %v789, %v789
        %v1046 = vmul.f32 %v790, %v790
        %v1047 = vmul.f32 %v791, %v791
        %v1048 = vmul.f32 %v792, %v792
        %v1049 = vmul.f32 %v793, %v793
        %v1050 = vmul.f32 %v794, %v794
        %v1051 = vmul.f32 %v795, %v795
        %v1052 = vmul.f32 %v796, %v796
        %v1053 = vmul.f32 %v797, %v797
        %v1054 = vmul.f32 %v798, %v798
        %v1055 = vmul.f32 %v799, %v799
        %v1056 = vmul.f32 %v800, %v800
        %v1057 = vmul.f32 %v801, %v801
        %v1058 = vmul.f32 %v802, %v802
        %v1059 = vmul.f32 %v803, %v803
        %v1060 = vmul.f32 %v804, %v804
        %v1061 = vmul.f32 %v805, %v805
        %v1062 = vmul.f32 %v806, %v806
        %v1063 = vmul.f32 %v807, %v807
        %v1064 = vmul.f32 %v808, %v808
        %v1065 = vmul.f32 %v809, %v809
        %v1066 = vmul.f32 %v810, %v810
        %v1067 = vmul.f32 %v811, %v811
        %v1068 = vmul.f32 %v812, %v812
        %v1069 = vmul.f32 %v813, %v813
        %v1070 = vmul.f32 %v814, %v814
        %v1071 = vmul.f32 %v815, %v815
        %v1072 = vmul.f32 %v816, %v816
        %v1073 = vmul.f32 %v817, %v817
        %v1074 = vmul.f32 %v818, %v818
        %v1075 = vmul.f32 %v819, %v819
        %v1076 = vmul.f32 %v820, %v820
        %v1077 = vmul.f32 %v821, %v821
        %v1078 = vmul.f32 %v822, %v822
        %v1079 = vmul.f32 %v823, %v823
        %v1080 = vmul.f32 %v824, %v824
        %v1081 = vmul.f32 %v825, %v825
        %v1082 = vmul.f32 %v826, %v826
        %v1083 = vmul.f32 %v827, %v827
        %v1084 = vmul.f32 %v828, %v828
        %v1085 = vmul.f32 %v829, %v829
        %v1086 = vmul.f32 %v830, %v830
        %v1087 = vmul.f32 %v831, %v831
        %v1088 = vmul.f32 %v832, %v832
        %v1089 = vmul.f32 %v833, %v833
        %v1090 = vmul.f32 %v834, %v834
        %v1091 = vmul.f32 %v835, %v835
        %v1092 = vmul.f32 %v836, %v836
        %v1093 = vmul.f32 %v837, %v837
        %v1094 = vmul.f32 %v838, %v838
        %v1095 = vmul.f32 %v839, %v839
        %v1096 = vmul.f32 %v840, %v840
        %v1097 = vmul.f32 %v841, %v841
        %v1098 = vmul.f32 %v842, %v842
        %v1099 = vmul.f32 %v843, %v843
        %v1100 = vmul.f32 %v844, %v844
        %v1101 = vmul.f32 %v845, %v845
        %v1102 = vmul.f32 %v846, %v846
        %v1103 = vmul.f32 %v847, %v847
        %v1104 = vmul.f32 %v848, %v848
        %v1105 = vmul.f32 %v849, %v849
        %v1106 = vmul.f32 %v850, %v850
        %v1107 = vmul.f32 %v851, %v851
        %v1108 = vmul.f32 %v852, %v852
        %v1109 = vmul.f32 %v853, %v853
        %v1110 = vmul.f32 %v854, %v854
        %v1111 = vmul.f32 %v855, %v855
        %v1112 = vmul.f32 %v856, %v856
        %v1113 = vmul.f32 %v857, %v857
        %v1114 = vmul.f32 %v858, %v858
        %v1115 = vmul.f32 %v859, %v859
        %v1116 = vmul.f32 %v860, %v860
        %v1117 = vmul.f32 %v861, %v861
        %v1118 = vmul.f32 %v862, %v862
        %v1119 = vmul.f32 %v863, %v863
        %v1120 = vmul.f32 %v864, %v864
        %v1121 = vadd.f32 %v865, %v869
        %v1122 = vadd.f32 %v1121, %v873
        %v1123 = vadd.f32 %v1122, %v877
        %v1124 = vadd.f32 %v1123, %v881
        %v1125 = vadd.f32 %v1124, %v885
        %v1126 = vadd.f32 %v1125, %v889
        %v1127 = vadd.f32 %v1126, %v893
        %v1128 = vadd.f32 %v1127, %v897
        %v1129 = vadd.f32 %v1128, %v901
        %v1130 = vadd.f32 %v1129, %v905
        %v1131 = vadd.f32 %v1130, %v909
        %v1132 = vadd.f32 %v1131, %v913
        %v1133 = vadd.f32 %v1132, %v917
        %v1134 = vadd.f32 %v1133, %v921
        %v1135 = vadd.f32 %v1134, %v925
        %v1136 = vadd.f32 %v1135, %v929
        %v1137 = vadd.f32 %v1136, %v933
        %v1138 = vadd.f32 %v1137, %v937
        %v1139 = vadd.f32 %v1138, %v941
        %v1140 = vadd.f32 %v1139, %v945
        %v1141 = vadd.f32 %v1140, %v949
        %v1142 = vadd.f32 %v1141, %v953
        %v1143 = vadd.f32 %v1142, %v957
        %v1144 = vadd.f32 %v1143, %v961
        %v1145 = vadd.f32 %v1144, %v965
        %v1146 = vadd.f32 %v1145, %v969
        %v1147 = vadd.f32 %v1146, %v973
        %v1148 = vadd.f32 %v1147, %v977
        %v1149 = vadd.f32 %v1148, %v981
        %v1150 = vadd.f32 %v1149, %v985
        %v1151 = vadd.f32 %v1150, %v989
        %v1152 = vadd.f32 %v1151, %v993
        %v1153 = vadd.f32 %v1152, %v997
        %v1154 = vadd.f32 %v1153, %v1001
        %v1155 = vadd.f32 %v1154, %v1005
        %v1156 = vadd.f32 %v1155, %v1009
        %v1157 = vadd.f32 %v1156, %v1013
        %v1158 = vadd.f32 %v1157, %v1017
        %v1159 = vadd.f32 %v1158, %v1021
        %v1160 = vadd.f32 %v1159, %v1025
        %v1161 = vadd.f32 %v1160, %v1029
        %v1162 = vadd.f32 %v1161, %v1033
        %v1163 = vadd.f32 %v1162, %v1037
        %v1164 = vadd.f32 %v1163, %v1041
        %v1165 = vadd.f32 %v1164, %v1045
        %v1166 = vadd.f32 %v1165, %v1049
        %v1167 = vadd.f32 %v1166, %v1053
        %v1168 = vadd.f32 %v1167, %v1057
        %v1169 = vadd.f32 %v1168, %v1061
        %v1170 = vadd.f32 %v1169, %v1065
        %v1171 = vadd.f32 %v1170, %v1069
        %v1172 = vadd.f32 %v1171, %v1073
        %v1173 = vadd.f32 %v1172, %v1077
        %v1174 = vadd.f32 %v1173, %v1081
        %v1175 = vadd.f32 %v1174, %v1085
        %v1176 = vadd.f32 %v1175, %v1089
        %v1177 = vadd.f32 %v1176, %v1093
        %v1178 = vadd.f32 %v1177, %v1097
        %v1179 = vadd.f32 %v1178, %v1101
        %v1180 = vadd.f32 %v1179, %v1105
        %v1181 = vadd.f32 %v1180, %v1109
        %v1182 = vadd.f32 %v1181, %v1113
        %v1183 = vadd.f32 %v1182, %v1117
        %v1184 = vrot.slane %v1183, 4
        %v1185 = vadd.f32 %v1183, %v1184
        %v1186 = vrot.slane %v1185, 2
        %v1187 = vadd.f32 %v1185, %v1186
        %v1188 = vrot.slane %v1187, 1
        %v1189 = vadd.f32 %v1187, %v1188
        %v1190 = vadd.f32 %v866, %v870
        %v1191 = vadd.f32 %v1190, %v874
        %v1192 = vadd.f32 %v1191, %v878
        %v1193 = vadd.f32 %v1192, %v882
        %v1194 = vadd.f32 %v1193, %v886
        %v1195 = vadd.f32 %v1194, %v890
        %v1196 = vadd.f32 %v1195, %v894
        %v1197 = vadd.f32 %v1196, %v898
        %v1198 = vadd.f32 %v1197, %v902
        %v1199 = vadd.f32 %v1198, %v906
        %v1200 = vadd.f32 %v1199, %v910
        %v1201 = vadd.f32 %v1200, %v914
        %v1202 = vadd.f32 %v1201, %v918
        %v1203 = vadd.f32 %v1202, %v922
        %v1204 = vadd.f32 %v1203, %v926
        %v1205 = vadd.f32 %v1204, %v930
        %v1206 = vadd.f32 %v1205, %v934
        %v1207 = vadd.f32 %v1206, %v938
        %v1208 = vadd.f32 %v1207, %v942
        %v1209 = vadd.f32 %v1208, %v946
        %v1210 = vadd.f32 %v1209, %v950
        %v1211 = vadd.f32 %v1210, %v954
        %v1212 = vadd.f32 %v1211, %v958
        %v1213 = vadd.f32 %v1212, %v962
        %v1214 = vadd.f32 %v1213, %v966
        %v1215 = vadd.f32 %v1214, %v970
        %v1216 = vadd.f32 %v1215, %v974
        %v1217 = vadd.f32 %v1216, %v978
        %v1218 = vadd.f32 %v1217, %v982
        %v1219 = vadd.f32 %v1218, %v986
        %v1220 = vadd.f32 %v1219, %v990
        %v1221 = vadd.f32 %v1220, %v994
        %v1222 = vadd.f32 %v1221, %v998
        %v1223 = vadd.f32 %v1222, %v1002
        %v1224 = vadd.f32 %v1223, %v1006
        %v1225 = vadd.f32 %v1224, %v1010
        %v1226 = vadd.f32 %v1225, %v1014
        %v1227 = vadd.f32 %v1226, %v1018
        %v1228 = vadd.f32 %v1227, %v1022
        %v1229 = vadd.f32 %v1228, %v1026
        %v1230 = vadd.f32 %v1229, %v1030
        %v1231 = vadd.f32 %v1230, %v1034
        %v1232 = vadd.f32 %v1231, %v1038
        %v1233 = vadd.f32 %v1232, %v1042
        %v1234 = vadd.f32 %v1233, %v1046
        %v1235 = vadd.f32 %v1234, %v1050
        %v1236 = vadd.f32 %v1235, %v1054
        %v1237 = vadd.f32 %v1236, %v1058
        %v1238 = vadd.f32 %v1237, %v1062
        %v1239 = vadd.f32 %v1238, %v1066
        %v1240 = vadd.f32 %v1239, %v1070
        %v1241 = vadd.f32 %v1240, %v1074
        %v1242 = vadd.f32 %v1241, %v1078
        %v1243 = vadd.f32 %v1242, %v1082
        %v1244 = vadd.f32 %v1243, %v1086
        %v1245 = vadd.f32 %v1244, %v1090
        %v1246 = vadd.f32 %v1245, %v1094
        %v1247 = vadd.f32 %v1246, %v1098
        %v1248 = vadd.f32 %v1247, %v1102
        %v1249 = vadd.f32 %v1248, %v1106
        %v1250 = vadd.f32 %v1249, %v1110
        %v1251 = vadd.f32 %v1250, %v1114
        %v1252 = vadd.f32 %v1251, %v1118
        %v1253 = vrot.slane %v1252, 4
        %v1254 = vadd.f32 %v1252, %v1253
        %v1255 = vrot.slane %v1254, 2
        %v1256 = vadd.f32 %v1254, %v1255
        %v1257 = vrot.slane %v1256, 1
        %v1258 = vadd.f32 %v1256, %v1257
        %v1259 = vadd.f32 %v867, %v871
        %v1260 = vadd.f32 %v1259, %v875
        %v1261 = vadd.f32 %v1260, %v879
        %v1262 = vadd.f32 %v1261, %v883
        %v1263 = vadd.f32 %v1262, %v887
        %v1264 = vadd.f32 %v1263, %v891
        %v1265 = vadd.f32 %v1264, %v895
        %v1266 = vadd.f32 %v1265, %v899
        %v1267 = vadd.f32 %v1266, %v903
        %v1268 = vadd.f32 %v1267, %v907
        %v1269 = vadd.f32 %v1268, %v911
        %v1270 = vadd.f32 %v1269, %v915
        %v1271 = vadd.f32 %v1270, %v919
        %v1272 = vadd.f32 %v1271, %v923
        %v1273 = vadd.f32 %v1272, %v927
        %v1274 = vadd.f32 %v1273, %v931
        %v1275 = vadd.f32 %v1274, %v935
        %v1276 = vadd.f32 %v1275, %v939
        %v1277 = vadd.f32 %v1276, %v943
        %v1278 = vadd.f32 %v1277, %v947
        %v1279 = vadd.f32 %v1278, %v951
        %v1280 = vadd.f32 %v1279, %v955
        %v1281 = vadd.f32 %v1280, %v959
        %v1282 = vadd.f32 %v1281, %v963
        %v1283 = vadd.f32 %v1282, %v967
        %v1284 = vadd.f32 %v1283, %v971
        %v1285 = vadd.f32 %v1284, %v975
        %v1286 = vadd.f32 %v1285, %v979
        %v1287 = vadd.f32 %v1286, %v983
        %v1288 = vadd.f32 %v1287, %v987
        %v1289 = vadd.f32 %v1288, %v991
        %v1290 = vadd.f32 %v1289, %v995
        %v1291 = vadd.f32 %v1290, %v999
        %v1292 = vadd.f32 %v1291, %v1003
        %v1293 = vadd.f32 %v1292, %v1007
        %v1294 = vadd.f32 %v1293, %v1011
        %v1295 = vadd.f32 %v1294, %v1015
        %v1296 = vadd.f32 %v1295, %v1019
        %v1297 = vadd.f32 %v1296, %v1023
        %v1298 = vadd.f32 %v1297, %v1027
        %v1299 = vadd.f32 %v1298, %v1031
        %v1300 = vadd.f32 %v1299, %v1035
        %v1301 = vadd.f32 %v1300, %v1039
        %v1302 = vadd.f32 %v1301, %v1043
        %v1303 = vadd.f32 %v1302, %v1047
        %v1304 = vadd.f32 %v1303, %v1051
        %v1305 = vadd.f32 %v1304, %v1055
        %v1306 = vadd.f32 %v1305, %v1059
        %v1307 = vadd.f32 %v1306, %v1063
        %v1308 = vadd.f32 %v1307, %v1067
        %v1309 = vadd.f32 %v1308, %v1071
        %v1310 = vadd.f32 %v1309, %v1075
        %v1311 = vadd.f32 %v1310, %v1079
        %v1312 = vadd.f32 %v1311, %v1083
        %v1313 = vadd.f32 %v1312, %v1087
        %v1314 = vadd.f32 %v1313, %v1091
        %v1315 = vadd.f32 %v1314, %v1095
        %v1316 = vadd.f32 %v1315, %v1099
        %v1317 = vadd.f32 %v1316, %v1103
        %v1318 = vadd.f32 %v1317, %v1107
        %v1319 = vadd.f32 %v1318, %v1111
        %v1320 = vadd.f32 %v1319, %v1115
        %v1321 = vadd.f32 %v1320, %v1119
        %v1322 = vrot.slane %v1321, 4
        %v1323 = vadd.f32 %v1321, %v1322
        %v1324 = vrot.slane %v1323, 2
        %v1325 = vadd.f32 %v1323, %v1324
        %v1326 = vrot.slane %v1325, 1
        %v1327 = vadd.f32 %v1325, %v1326
        %v1328 = vadd.f32 %v868, %v872
        %v1329 = vadd.f32 %v1328, %v876
        %v1330 = vadd.f32 %v1329, %v880
        %v1331 = vadd.f32 %v1330, %v884
        %v1332 = vadd.f32 %v1331, %v888
        %v1333 = vadd.f32 %v1332, %v892
        %v1334 = vadd.f32 %v1333, %v896
        %v1335 = vadd.f32 %v1334, %v900
        %v1336 = vadd.f32 %v1335, %v904
        %v1337 = vadd.f32 %v1336, %v908
        %v1338 = vadd.f32 %v1337, %v912
        %v1339 = vadd.f32 %v1338, %v916
        %v1340 = vadd.f32 %v1339, %v920
        %v1341 = vadd.f32 %v1340, %v924
        %v1342 = vadd.f32 %v1341, %v928
        %v1343 = vadd.f32 %v1342, %v932
        %v1344 = vadd.f32 %v1343, %v936
        %v1345 = vadd.f32 %v1344, %v940
        %v1346 = vadd.f32 %v1345, %v944
        %v1347 = vadd.f32 %v1346, %v948
        %v1348 = vadd.f32 %v1347, %v952
        %v1349 = vadd.f32 %v1348, %v956
        %v1350 = vadd.f32 %v1349, %v960
        %v1351 = vadd.f32 %v1350, %v964
        %v1352 = vadd.f32 %v1351, %v968
        %v1353 = vadd.f32 %v1352, %v972
        %v1354 = vadd.f32 %v1353, %v976
        %v1355 = vadd.f32 %v1354, %v980
        %v1356 = vadd.f32 %v1355, %v984
        %v1357 = vadd.f32 %v1356, %v988
        %v1358 = vadd.f32 %v1357, %v992
        %v1359 = vadd.f32 %v1358, %v996
        %v1360 = vadd.f32 %v1359, %v1000
        %v1361 = vadd.f32 %v1360, %v1004
        %v1362 = vadd.f32 %v1361, %v1008
        %v1363 = vadd.f32 %v1362, %v1012
        %v1364 = vadd.f32 %v1363, %v1016
        %v1365 = vadd.f32 %v1364, %v1020
        %v1366 = vadd.f32 %v1365, %v1024
        %v1367 = vadd.f32 %v1366, %v1028
        %v1368 = vadd.f32 %v1367, %v1032
        %v1369 = vadd.f32 %v1368, %v1036
        %v1370 = vadd.f32 %v1369, %v1040
        %v1371 = vadd.f32 %v1370, %v1044
        %v1372 = vadd.f32 %v1371, %v1048
        %v1373 = vadd.f32 %v1372, %v1052
        %v1374 = vadd.f32 %v1373, %v1056
        %v1375 = vadd.f32 %v1374, %v1060
        %v1376 = vadd.f32 %v1375, %v1064
        %v1377 = vadd.f32 %v1376, %v1068
        %v1378 = vadd.f32 %v1377, %v1072
        %v1379 = vadd.f32 %v1378, %v1076
        %v1380 = vadd.f32 %v1379, %v1080
        %v1381 = vadd.f32 %v1380, %v1084
        %v1382 = vadd.f32 %v1381, %v1088
        %v1383 = vadd.f32 %v1382, %v1092
        %v1384 = vadd.f32 %v1383, %v1096
        %v1385 = vadd.f32 %v1384, %v1100
        %v1386 = vadd.f32 %v1385, %v1104
        %v1387 = vadd.f32 %v1386, %v1108
        %v1388 = vadd.f32 %v1387, %v1112
        %v1389 = vadd.f32 %v1388, %v1116
        %v1390 = vadd.f32 %v1389, %v1120
        %v1391 = vrot.slane %v1390, 4
        %v1392 = vadd.f32 %v1390, %v1391
        %v1393 = vrot.slane %v1392, 2
        %v1394 = vadd.f32 %v1392, %v1393
        %v1395 = vrot.slane %v1394, 1
        %v1396 = vadd.f32 %v1394, %v1395
        %v1397 = vmax.f32 %v1189, 1e-12
        %v1398 = vmax.f32 %v1258, 1e-12
        %v1399 = vmax.f32 %v1327, 1e-12
        %v1400 = vmax.f32 %v1396, 1e-12
        %v1401 = vrsqrt.pop %v1397
        %v1402 = vrsqrt.pop %v1398
        %v1403 = vrsqrt.pop %v1399
        %v1404 = vrsqrt.pop %v1400
        %v1405 = vld [vmem:[%s1] sm:$0xff]
        %v1406 = vld [vmem:[%s1 + $0x8] sm:$0xff]
        %v1409 = vunpack.c.l.b16 %v1405
        %v1410 = vunpack.c.h.b16 %v1405
        %v1411 = vunpack.c.l.b16 %v1406
        %v1412 = vunpack.c.h.b16 %v1406
        %v1413 = vpack.c.b16 %v1409, %v1409
        %v1414 = vpack.c.b16 %v1410, %v1410
        %v1415 = vpack.c.b16 %v1411, %v1411
        %v1416 = vpack.c.b16 %v1412, %v1412
        %v1549 = vunpack.c.l.b16 %v481
        %v1550 = vunpack.c.h.b16 %v481
        %v1551 = vunpack.c.l.b16 %v482
        %v1552 = vunpack.c.h.b16 %v482
        %v1553 = vunpack.c.l.b16 %v483
        %v1554 = vunpack.c.h.b16 %v483
        %v1555 = vunpack.c.l.b16 %v484
        %v1556 = vunpack.c.h.b16 %v484
        %v1557 = vunpack.c.l.b16 %v485
        %v1558 = vunpack.c.h.b16 %v485
        %v1559 = vunpack.c.l.b16 %v486
        %v1560 = vunpack.c.h.b16 %v486
        %v1561 = vunpack.c.l.b16 %v487
        %v1562 = vunpack.c.h.b16 %v487
        %v1563 = vunpack.c.l.b16 %v488
        %v1564 = vunpack.c.h.b16 %v488
        %v1565 = vunpack.c.l.b16 %v489
        %v1566 = vunpack.c.h.b16 %v489
        %v1567 = vunpack.c.l.b16 %v490
        %v1568 = vunpack.c.h.b16 %v490
        %v1569 = vunpack.c.l.b16 %v491
        %v1570 = vunpack.c.h.b16 %v491
        %v1571 = vunpack.c.l.b16 %v492
        %v1572 = vunpack.c.h.b16 %v492
        %v1573 = vunpack.c.l.b16 %v493
        %v1574 = vunpack.c.h.b16 %v493
        %v1575 = vunpack.c.l.b16 %v494
        %v1576 = vunpack.c.h.b16 %v494
        %v1577 = vunpack.c.l.b16 %v495
        %v1578 = vunpack.c.h.b16 %v495
        %v1579 = vunpack.c.l.b16 %v496
        %v1580 = vunpack.c.h.b16 %v496
        %v1581 = vunpack.c.l.b16 %v497
        %v1582 = vunpack.c.h.b16 %v497
        %v1583 = vunpack.c.l.b16 %v498
        %v1584 = vunpack.c.h.b16 %v498
        %v1585 = vunpack.c.l.b16 %v499
        %v1586 = vunpack.c.h.b16 %v499
        %v1587 = vunpack.c.l.b16 %v500
        %v1588 = vunpack.c.h.b16 %v500
        %v1589 = vunpack.c.l.b16 %v501
        %v1590 = vunpack.c.h.b16 %v501
        %v1591 = vunpack.c.l.b16 %v502
        %v1592 = vunpack.c.h.b16 %v502
        %v1593 = vunpack.c.l.b16 %v503
        %v1594 = vunpack.c.h.b16 %v503
        %v1595 = vunpack.c.l.b16 %v504
        %v1596 = vunpack.c.h.b16 %v504
        %v1597 = vunpack.c.l.b16 %v505
        %v1598 = vunpack.c.h.b16 %v505
        %v1599 = vunpack.c.l.b16 %v506
        %v1600 = vunpack.c.h.b16 %v506
        %v1601 = vunpack.c.l.b16 %v507
        %v1602 = vunpack.c.h.b16 %v507
        %v1603 = vunpack.c.l.b16 %v508
        %v1604 = vunpack.c.h.b16 %v508
        %v1605 = vunpack.c.l.b16 %v509
        %v1606 = vunpack.c.h.b16 %v509
        %v1607 = vunpack.c.l.b16 %v510
        %v1608 = vunpack.c.h.b16 %v510
        %v1609 = vunpack.c.l.b16 %v511
        %v1610 = vunpack.c.h.b16 %v511
        %v1611 = vunpack.c.l.b16 %v512
        %v1612 = vunpack.c.h.b16 %v512
        %v1613 = vunpack.c.l.b16 %v513
        %v1614 = vunpack.c.h.b16 %v513
        %v1615 = vunpack.c.l.b16 %v514
        %v1616 = vunpack.c.h.b16 %v514
        %v1617 = vunpack.c.l.b16 %v515
        %v1618 = vunpack.c.h.b16 %v515
        %v1619 = vunpack.c.l.b16 %v516
        %v1620 = vunpack.c.h.b16 %v516
        %v1621 = vunpack.c.l.b16 %v517
        %v1622 = vunpack.c.h.b16 %v517
        %v1623 = vunpack.c.l.b16 %v518
        %v1624 = vunpack.c.h.b16 %v518
        %v1625 = vunpack.c.l.b16 %v519
        %v1626 = vunpack.c.h.b16 %v519
        %v1627 = vunpack.c.l.b16 %v520
        %v1628 = vunpack.c.h.b16 %v520
        %v1629 = vunpack.c.l.b16 %v521
        %v1630 = vunpack.c.h.b16 %v521
        %v1631 = vunpack.c.l.b16 %v522
        %v1632 = vunpack.c.h.b16 %v522
        %v1633 = vunpack.c.l.b16 %v523
        %v1634 = vunpack.c.h.b16 %v523
        %v1635 = vunpack.c.l.b16 %v524
        %v1636 = vunpack.c.h.b16 %v524
        %v1637 = vunpack.c.l.b16 %v525
        %v1638 = vunpack.c.h.b16 %v525
        %v1639 = vunpack.c.l.b16 %v526
        %v1640 = vunpack.c.h.b16 %v526
        %v1641 = vunpack.c.l.b16 %v527
        %v1642 = vunpack.c.h.b16 %v527
        %v1643 = vunpack.c.l.b16 %v528
        %v1644 = vunpack.c.h.b16 %v528
        %v1645 = vunpack.c.l.b16 %v529
        %v1646 = vunpack.c.h.b16 %v529
        %v1647 = vunpack.c.l.b16 %v530
        %v1648 = vunpack.c.h.b16 %v530
        %v1649 = vunpack.c.l.b16 %v531
        %v1650 = vunpack.c.h.b16 %v531
        %v1651 = vunpack.c.l.b16 %v532
        %v1652 = vunpack.c.h.b16 %v532
        %v1653 = vunpack.c.l.b16 %v533
        %v1654 = vunpack.c.h.b16 %v533
        %v1655 = vunpack.c.l.b16 %v534
        %v1656 = vunpack.c.h.b16 %v534
        %v1657 = vunpack.c.l.b16 %v535
        %v1658 = vunpack.c.h.b16 %v535
        %v1659 = vunpack.c.l.b16 %v536
        %v1660 = vunpack.c.h.b16 %v536
        %v1661 = vunpack.c.l.b16 %v537
        %v1662 = vunpack.c.h.b16 %v537
        %v1663 = vunpack.c.l.b16 %v538
        %v1664 = vunpack.c.h.b16 %v538
        %v1665 = vunpack.c.l.b16 %v539
        %v1666 = vunpack.c.h.b16 %v539
        %v1667 = vunpack.c.l.b16 %v540
        %v1668 = vunpack.c.h.b16 %v540
        %v1669 = vunpack.c.l.b16 %v541
        %v1670 = vunpack.c.h.b16 %v541
        %v1671 = vunpack.c.l.b16 %v542
        %v1672 = vunpack.c.h.b16 %v542
        %v1673 = vunpack.c.l.b16 %v543
        %v1674 = vunpack.c.h.b16 %v543
        %v1675 = vunpack.c.l.b16 %v544
        %v1676 = vunpack.c.h.b16 %v544
        %v1677 = vunpack.c.l.b16 %v545
        %v1678 = vunpack.c.h.b16 %v545
        %v1679 = vunpack.c.l.b16 %v546
        %v1680 = vunpack.c.h.b16 %v546
        %v1681 = vunpack.c.l.b16 %v547
        %v1682 = vunpack.c.h.b16 %v547
        %v1683 = vunpack.c.l.b16 %v548
        %v1684 = vunpack.c.h.b16 %v548
        %v1685 = vunpack.c.l.b16 %v549
        %v1686 = vunpack.c.h.b16 %v549
        %v1687 = vunpack.c.l.b16 %v550
        %v1688 = vunpack.c.h.b16 %v550
        %v1689 = vunpack.c.l.b16 %v551
        %v1690 = vunpack.c.h.b16 %v551
        %v1691 = vunpack.c.l.b16 %v552
        %v1692 = vunpack.c.h.b16 %v552
        %v1693 = vunpack.c.l.b16 %v553
        %v1694 = vunpack.c.h.b16 %v553
        %v1695 = vunpack.c.l.b16 %v554
        %v1696 = vunpack.c.h.b16 %v554
        %v1697 = vunpack.c.l.b16 %v555
        %v1698 = vunpack.c.h.b16 %v555
        %v1699 = vunpack.c.l.b16 %v556
        %v1700 = vunpack.c.h.b16 %v556
        %v1701 = vunpack.c.l.b16 %v557
        %v1702 = vunpack.c.h.b16 %v557
        %v1703 = vunpack.c.l.b16 %v558
        %v1704 = vunpack.c.h.b16 %v558
        %v1705 = vunpack.c.l.b16 %v559
        %v1706 = vunpack.c.h.b16 %v559
        %v1707 = vunpack.c.l.b16 %v560
        %v1708 = vunpack.c.h.b16 %v560
        %v1709 = vunpack.c.l.b16 %v561
        %v1710 = vunpack.c.h.b16 %v561
        %v1711 = vunpack.c.l.b16 %v562
        %v1712 = vunpack.c.h.b16 %v562
        %v1713 = vunpack.c.l.b16 %v563
        %v1714 = vunpack.c.h.b16 %v563
        %v1715 = vunpack.c.l.b16 %v564
        %v1716 = vunpack.c.h.b16 %v564
        %v1717 = vunpack.c.l.b16 %v565
        %v1718 = vunpack.c.h.b16 %v565
        %v1719 = vunpack.c.l.b16 %v566
        %v1720 = vunpack.c.h.b16 %v566
        %v1721 = vunpack.c.l.b16 %v567
        %v1722 = vunpack.c.h.b16 %v567
        %v1723 = vunpack.c.l.b16 %v568
        %v1724 = vunpack.c.h.b16 %v568
        %v1725 = vunpack.c.l.b16 %v569
        %v1726 = vunpack.c.h.b16 %v569
        %v1727 = vunpack.c.l.b16 %v570
        %v1728 = vunpack.c.h.b16 %v570
        %v1729 = vunpack.c.l.b16 %v571
        %v1730 = vunpack.c.h.b16 %v571
        %v1731 = vunpack.c.l.b16 %v572
        %v1732 = vunpack.c.h.b16 %v572
        %v1733 = vunpack.c.l.b16 %v573
        %v1734 = vunpack.c.h.b16 %v573
        %v1735 = vunpack.c.l.b16 %v574
        %v1736 = vunpack.c.h.b16 %v574
        %v1737 = vunpack.c.l.b16 %v575
        %v1738 = vunpack.c.h.b16 %v575
        %v1739 = vunpack.c.l.b16 %v576
        %v1740 = vunpack.c.h.b16 %v576
        %v1741 = vunpack.c.l.b16 %v577
        %v1742 = vunpack.c.h.b16 %v577
        %v1743 = vunpack.c.l.b16 %v578
        %v1744 = vunpack.c.h.b16 %v578
        %v1745 = vunpack.c.l.b16 %v579
        %v1746 = vunpack.c.h.b16 %v579
        %v1747 = vunpack.c.l.b16 %v580
        %v1748 = vunpack.c.h.b16 %v580
        %v1749 = vunpack.c.l.b16 %v581
        %v1750 = vunpack.c.h.b16 %v581
        %v1751 = vunpack.c.l.b16 %v582
        %v1752 = vunpack.c.h.b16 %v582
        %v1753 = vunpack.c.l.b16 %v583
        %v1754 = vunpack.c.h.b16 %v583
        %v1755 = vunpack.c.l.b16 %v584
        %v1756 = vunpack.c.h.b16 %v584
        %v1757 = vunpack.c.l.b16 %v585
        %v1758 = vunpack.c.h.b16 %v585
        %v1759 = vunpack.c.l.b16 %v586
        %v1760 = vunpack.c.h.b16 %v586
        %v1761 = vunpack.c.l.b16 %v587
        %v1762 = vunpack.c.h.b16 %v587
        %v1763 = vunpack.c.l.b16 %v588
        %v1764 = vunpack.c.h.b16 %v588
        %v1765 = vunpack.c.l.b16 %v589
        %v1766 = vunpack.c.h.b16 %v589
        %v1767 = vunpack.c.l.b16 %v590
        %v1768 = vunpack.c.h.b16 %v590
        %v1769 = vunpack.c.l.b16 %v591
        %v1770 = vunpack.c.h.b16 %v591
        %v1771 = vunpack.c.l.b16 %v592
        %v1772 = vunpack.c.h.b16 %v592
        %v1773 = vunpack.c.l.b16 %v593
        %v1774 = vunpack.c.h.b16 %v593
        %v1775 = vunpack.c.l.b16 %v594
        %v1776 = vunpack.c.h.b16 %v594
        %v1777 = vunpack.c.l.b16 %v595
        %v1778 = vunpack.c.h.b16 %v595
        %v1779 = vunpack.c.l.b16 %v596
        %v1780 = vunpack.c.h.b16 %v596
        %v1781 = vunpack.c.l.b16 %v597
        %v1782 = vunpack.c.h.b16 %v597
        %v1783 = vunpack.c.l.b16 %v598
        %v1784 = vunpack.c.h.b16 %v598
        %v1785 = vunpack.c.l.b16 %v599
        %v1786 = vunpack.c.h.b16 %v599
        %v1787 = vunpack.c.l.b16 %v600
        %v1788 = vunpack.c.h.b16 %v600
        %v1789 = vunpack.c.l.b16 %v601
        %v1790 = vunpack.c.h.b16 %v601
        %v1791 = vunpack.c.l.b16 %v602
        %v1792 = vunpack.c.h.b16 %v602
        %v1793 = vunpack.c.l.b16 %v603
        %v1794 = vunpack.c.h.b16 %v603
        %v1795 = vunpack.c.l.b16 %v604
        %v1796 = vunpack.c.h.b16 %v604
        %v1797 = vunpack.c.l.b16 %v605
        %v1798 = vunpack.c.h.b16 %v605
        %v1799 = vunpack.c.l.b16 %v606
        %v1800 = vunpack.c.h.b16 %v606
        %v1801 = vunpack.c.l.b16 %v607
        %v1802 = vunpack.c.h.b16 %v607
        %v1803 = vunpack.c.l.b16 %v608
        %v1804 = vunpack.c.h.b16 %v608
        %v1805 = vpack.c.b16 %v1553, %v1549
        %v1806 = vpack.c.b16 %v1554, %v1550
        %v1807 = vpack.c.b16 %v1555, %v1551
        %v1808 = vpack.c.b16 %v1556, %v1552
        %v1809 = vpack.c.b16 %v1561, %v1557
        %v1810 = vpack.c.b16 %v1562, %v1558
        %v1811 = vpack.c.b16 %v1563, %v1559
        %v1812 = vpack.c.b16 %v1564, %v1560
        %v1813 = vpack.c.b16 %v1569, %v1565
        %v1814 = vpack.c.b16 %v1570, %v1566
        %v1815 = vpack.c.b16 %v1571, %v1567
        %v1816 = vpack.c.b16 %v1572, %v1568
        %v1817 = vpack.c.b16 %v1577, %v1573
        %v1818 = vpack.c.b16 %v1578, %v1574
        %v1819 = vpack.c.b16 %v1579, %v1575
        %v1820 = vpack.c.b16 %v1580, %v1576
        %v1821 = vpack.c.b16 %v1585, %v1581
        %v1822 = vpack.c.b16 %v1586, %v1582
        %v1823 = vpack.c.b16 %v1587, %v1583
        %v1824 = vpack.c.b16 %v1588, %v1584
        %v1825 = vpack.c.b16 %v1593, %v1589
        %v1826 = vpack.c.b16 %v1594, %v1590
        %v1827 = vpack.c.b16 %v1595, %v1591
        %v1828 = vpack.c.b16 %v1596, %v1592
        %v1829 = vpack.c.b16 %v1601, %v1597
        %v1830 = vpack.c.b16 %v1602, %v1598
        %v1831 = vpack.c.b16 %v1603, %v1599
        %v1832 = vpack.c.b16 %v1604, %v1600
        %v1833 = vpack.c.b16 %v1609, %v1605
        %v1834 = vpack.c.b16 %v1610, %v1606
        %v1835 = vpack.c.b16 %v1611, %v1607
        %v1836 = vpack.c.b16 %v1612, %v1608
        %v1837 = vpack.c.b16 %v1617, %v1613
        %v1838 = vpack.c.b16 %v1618, %v1614
        %v1839 = vpack.c.b16 %v1619, %v1615
        %v1840 = vpack.c.b16 %v1620, %v1616
        %v1841 = vpack.c.b16 %v1625, %v1621
        %v1842 = vpack.c.b16 %v1626, %v1622
        %v1843 = vpack.c.b16 %v1627, %v1623
        %v1844 = vpack.c.b16 %v1628, %v1624
        %v1845 = vpack.c.b16 %v1633, %v1629
        %v1846 = vpack.c.b16 %v1634, %v1630
        %v1847 = vpack.c.b16 %v1635, %v1631
        %v1848 = vpack.c.b16 %v1636, %v1632
        %v1849 = vpack.c.b16 %v1641, %v1637
        %v1850 = vpack.c.b16 %v1642, %v1638
        %v1851 = vpack.c.b16 %v1643, %v1639
        %v1852 = vpack.c.b16 %v1644, %v1640
        %v1853 = vpack.c.b16 %v1649, %v1645
        %v1854 = vpack.c.b16 %v1650, %v1646
        %v1855 = vpack.c.b16 %v1651, %v1647
        %v1856 = vpack.c.b16 %v1652, %v1648
        %v1857 = vpack.c.b16 %v1657, %v1653
        %v1858 = vpack.c.b16 %v1658, %v1654
        %v1859 = vpack.c.b16 %v1659, %v1655
        %v1860 = vpack.c.b16 %v1660, %v1656
        %v1861 = vpack.c.b16 %v1665, %v1661
        %v1862 = vpack.c.b16 %v1666, %v1662
        %v1863 = vpack.c.b16 %v1667, %v1663
        %v1864 = vpack.c.b16 %v1668, %v1664
        %v1865 = vpack.c.b16 %v1673, %v1669
        %v1866 = vpack.c.b16 %v1674, %v1670
        %v1867 = vpack.c.b16 %v1675, %v1671
        %v1868 = vpack.c.b16 %v1676, %v1672
        %v1869 = vpack.c.b16 %v1681, %v1677
        %v1870 = vpack.c.b16 %v1682, %v1678
        %v1871 = vpack.c.b16 %v1683, %v1679
        %v1872 = vpack.c.b16 %v1684, %v1680
        %v1873 = vpack.c.b16 %v1689, %v1685
        %v1874 = vpack.c.b16 %v1690, %v1686
        %v1875 = vpack.c.b16 %v1691, %v1687
        %v1876 = vpack.c.b16 %v1692, %v1688
        %v1877 = vpack.c.b16 %v1697, %v1693
        %v1878 = vpack.c.b16 %v1698, %v1694
        %v1879 = vpack.c.b16 %v1699, %v1695
        %v1880 = vpack.c.b16 %v1700, %v1696
        %v1881 = vpack.c.b16 %v1705, %v1701
        %v1882 = vpack.c.b16 %v1706, %v1702
        %v1883 = vpack.c.b16 %v1707, %v1703
        %v1884 = vpack.c.b16 %v1708, %v1704
        %v1885 = vpack.c.b16 %v1713, %v1709
        %v1886 = vpack.c.b16 %v1714, %v1710
        %v1887 = vpack.c.b16 %v1715, %v1711
        %v1888 = vpack.c.b16 %v1716, %v1712
        %v1889 = vpack.c.b16 %v1721, %v1717
        %v1890 = vpack.c.b16 %v1722, %v1718
        %v1891 = vpack.c.b16 %v1723, %v1719
        %v1892 = vpack.c.b16 %v1724, %v1720
        %v1893 = vpack.c.b16 %v1729, %v1725
        %v1894 = vpack.c.b16 %v1730, %v1726
        %v1895 = vpack.c.b16 %v1731, %v1727
        %v1896 = vpack.c.b16 %v1732, %v1728
        %v1897 = vpack.c.b16 %v1737, %v1733
        %v1898 = vpack.c.b16 %v1738, %v1734
        %v1899 = vpack.c.b16 %v1739, %v1735
        %v1900 = vpack.c.b16 %v1740, %v1736
        %v1901 = vpack.c.b16 %v1745, %v1741
        %v1902 = vpack.c.b16 %v1746, %v1742
        %v1903 = vpack.c.b16 %v1747, %v1743
        %v1904 = vpack.c.b16 %v1748, %v1744
        %v1905 = vpack.c.b16 %v1753, %v1749
        %v1906 = vpack.c.b16 %v1754, %v1750
        %v1907 = vpack.c.b16 %v1755, %v1751
        %v1908 = vpack.c.b16 %v1756, %v1752
        %v1909 = vpack.c.b16 %v1761, %v1757
        %v1910 = vpack.c.b16 %v1762, %v1758
        %v1911 = vpack.c.b16 %v1763, %v1759
        %v1912 = vpack.c.b16 %v1764, %v1760
        %v1913 = vpack.c.b16 %v1769, %v1765
        %v1914 = vpack.c.b16 %v1770, %v1766
        %v1915 = vpack.c.b16 %v1771, %v1767
        %v1916 = vpack.c.b16 %v1772, %v1768
        %v1917 = vpack.c.b16 %v1777, %v1773
        %v1918 = vpack.c.b16 %v1778, %v1774
        %v1919 = vpack.c.b16 %v1779, %v1775
        %v1920 = vpack.c.b16 %v1780, %v1776
        %v1921 = vpack.c.b16 %v1785, %v1781
        %v1922 = vpack.c.b16 %v1786, %v1782
        %v1923 = vpack.c.b16 %v1787, %v1783
        %v1924 = vpack.c.b16 %v1788, %v1784
        %v1925 = vpack.c.b16 %v1793, %v1789
        %v1926 = vpack.c.b16 %v1794, %v1790
        %v1927 = vpack.c.b16 %v1795, %v1791
        %v1928 = vpack.c.b16 %v1796, %v1792
        %v1929 = vpack.c.b16 %v1801, %v1797
        %v1930 = vpack.c.b16 %v1802, %v1798
        %v1931 = vpack.c.b16 %v1803, %v1799
        %v1932 = vpack.c.b16 %v1804, %v1800
        %2061 = vmatprep.subr.bf16.mxu0 %v1834
        %2062 = vmatpush1.bf16.msra.mxu0 %v1833
        %2063 = vmatprep.subr.bf16.mxu0 %v1830
        %2064 = vmatpush1.bf16.msra.mxu0 %v1829
        %2065 = vmatprep.subr.bf16.mxu0 %v1826
        %2066 = vmatpush1.bf16.msra.mxu0 %v1825
        %2067 = vmatprep.subr.bf16.mxu0 %v1822
        %2068 = vmatpush1.bf16.msra.mxu0 %v1821
        %2069 = vmatprep.subr.bf16.mxu0 %v1818
        %2070 = vmatpush1.bf16.msra.mxu0 %v1817
        %2071 = vmatprep.subr.bf16.mxu0 %v1814
        %2072 = vmatpush1.bf16.msra.mxu0 %v1813
        %2073 = vmatprep.subr.bf16.mxu0 %v1810
        %2074 = vmatpush1.bf16.msra.mxu0 %v1809
        %2075 = vmatprep.subr.bf16.mxu0 %v1806
        %2076 = vmatpush1.bf16.msra.mxu0 %v1805
        %2077 = vmatprep.subr.bf16.mxu0 %v1866
        %2078 = vmatpush2.bf16.msra.mxu0 %v1865
        %2079 = vmatprep.subr.bf16.mxu0 %v1862
        %2080 = vmatpush2.bf16.msra.mxu0 %v1861
        %2081 = vmatprep.subr.bf16.mxu0 %v1858
        %2082 = vmatpush2.bf16.msra.mxu0 %v1857
        %2083 = vmatprep.subr.bf16.mxu0 %v1854
        %2084 = vmatpush2.bf16.msra.mxu0 %v1853
        %2085 = vmatprep.subr.bf16.mxu0 %v1850
        %2086 = vmatpush2.bf16.msra.mxu0 %v1849
        %2087 = vmatprep.subr.bf16.mxu0 %v1846
        %2088 = vmatpush2.bf16.msra.mxu0 %v1845
        %2089 = vmatprep.subr.bf16.mxu0 %v1842
        %2090 = vmatpush2.bf16.msra.mxu0 %v1841
        %2091 = vmatprep.subr.bf16.mxu0 %v1838
        %2092 = vmatpush2.bf16.msra.mxu0 %v1837
        %2093 = vmatprep.mubr.bf16.mxu0 %v1414
        %2094 = vmatmul.mubr.bf16.gmra.mxu0 %v1413
        %v2095 = vpop.f32.mrf.mxu0
        %v2096 = vadd.f32 0.0, %v2095
        %v2097 = vpop.f32.mrf.mxu0
        %v2098 = vadd.f32 0.0, %v2097
        %v2099 = vpop.f32.mrf.mxu0
        %v2100 = vpop.f32.mrf.mxu0
        %2101 = vdwg.mxu0
        %2102 = vmatprep.subr.bf16.mxu0 %v1898
        %2103 = vmatpush1.bf16.msra.mxu0 %v1897
        %2104 = vmatprep.subr.bf16.mxu0 %v1894
        %2105 = vmatpush1.bf16.msra.mxu0 %v1893
        %2106 = vmatprep.subr.bf16.mxu0 %v1890
        %2107 = vmatpush1.bf16.msra.mxu0 %v1889
        %2108 = vmatprep.subr.bf16.mxu0 %v1886
        %2109 = vmatpush1.bf16.msra.mxu0 %v1885
        %2110 = vmatprep.subr.bf16.mxu0 %v1882
        %2111 = vmatpush1.bf16.msra.mxu0 %v1881
        %2112 = vmatprep.subr.bf16.mxu0 %v1878
        %2113 = vmatpush1.bf16.msra.mxu0 %v1877
        %2114 = vmatprep.subr.bf16.mxu0 %v1874
        %2115 = vmatpush1.bf16.msra.mxu0 %v1873
        %2116 = vmatprep.subr.bf16.mxu0 %v1870
        %2117 = vmatpush1.bf16.msra.mxu0 %v1869
        %2118 = vmatprep.subr.bf16.mxu0 %v1930
        %2119 = vmatpush2.bf16.msra.mxu0 %v1929
        %2120 = vmatprep.subr.bf16.mxu0 %v1926
        %2121 = vmatpush2.bf16.msra.mxu0 %v1925
        %2122 = vmatprep.subr.bf16.mxu0 %v1922
        %2123 = vmatpush2.bf16.msra.mxu0 %v1921
        %2124 = vmatprep.subr.bf16.mxu0 %v1918
        %2125 = vmatpush2.bf16.msra.mxu0 %v1917
        %2126 = vmatprep.subr.bf16.mxu0 %v1914
        %2127 = vmatpush2.bf16.msra.mxu0 %v1913
        %2128 = vmatprep.subr.bf16.mxu0 %v1910
        %2129 = vmatpush2.bf16.msra.mxu0 %v1909
        %2130 = vmatprep.subr.bf16.mxu0 %v1906
        %2131 = vmatpush2.bf16.msra.mxu0 %v1905
        %2132 = vmatprep.subr.bf16.mxu0 %v1902
        %2133 = vmatpush2.bf16.msra.mxu0 %v1901
        %2134 = vmatprep.mubr.bf16.mxu0 %v1416
        %2135 = vmatmul.mubr.bf16.gmra.mxu0 %v1415
        %v2136 = vpop.f32.mrf.mxu0
        %v2137 = vadd.f32 %v2096, %v2136
        %v2138 = vpop.f32.mrf.mxu0
        %v2139 = vadd.f32 %v2098, %v2138
        %v2140 = vpop.f32.mrf.mxu0
        %v2141 = vpop.f32.mrf.mxu0
        %2142 = vdwg.mxu0
        %2143 = vmatprep.subr.bf16.mxu0 %v1836
        %2144 = vmatpush1.bf16.msra.mxu0 %v1835
        %2145 = vmatprep.subr.bf16.mxu0 %v1832
        %2146 = vmatpush1.bf16.msra.mxu0 %v1831
        %2147 = vmatprep.subr.bf16.mxu0 %v1828
        %2148 = vmatpush1.bf16.msra.mxu0 %v1827
        %2149 = vmatprep.subr.bf16.mxu0 %v1824
        %2150 = vmatpush1.bf16.msra.mxu0 %v1823
        %2151 = vmatprep.subr.bf16.mxu0 %v1820
        %2152 = vmatpush1.bf16.msra.mxu0 %v1819
        %2153 = vmatprep.subr.bf16.mxu0 %v1816
        %2154 = vmatpush1.bf16.msra.mxu0 %v1815
        %2155 = vmatprep.subr.bf16.mxu0 %v1812
        %2156 = vmatpush1.bf16.msra.mxu0 %v1811
        %2157 = vmatprep.subr.bf16.mxu0 %v1808
        %2158 = vmatpush1.bf16.msra.mxu0 %v1807
        %2159 = vmatprep.subr.bf16.mxu0 %v1868
        %2160 = vmatpush2.bf16.msra.mxu0 %v1867
        %2161 = vmatprep.subr.bf16.mxu0 %v1864
        %2162 = vmatpush2.bf16.msra.mxu0 %v1863
        %2163 = vmatprep.subr.bf16.mxu0 %v1860
        %2164 = vmatpush2.bf16.msra.mxu0 %v1859
        %2165 = vmatprep.subr.bf16.mxu0 %v1856
        %2166 = vmatpush2.bf16.msra.mxu0 %v1855
        %2167 = vmatprep.subr.bf16.mxu0 %v1852
        %2168 = vmatpush2.bf16.msra.mxu0 %v1851
        %2169 = vmatprep.subr.bf16.mxu0 %v1848
        %2170 = vmatpush2.bf16.msra.mxu0 %v1847
        %2171 = vmatprep.subr.bf16.mxu0 %v1844
        %2172 = vmatpush2.bf16.msra.mxu0 %v1843
        %2173 = vmatprep.subr.bf16.mxu0 %v1840
        %2174 = vmatpush2.bf16.msra.mxu0 %v1839
        %2175 = vmatprep.mubr.bf16.mxu0 %v1414
        %2176 = vmatmul.mubr.bf16.gmra.mxu0 %v1413
        %v2177 = vpop.f32.mrf.mxu0
        %v2178 = vadd.f32 0.0, %v2177
        %v2179 = vpop.f32.mrf.mxu0
        %v2180 = vadd.f32 0.0, %v2179
        %v2181 = vpop.f32.mrf.mxu0
        %v2182 = vpop.f32.mrf.mxu0
        %2183 = vdwg.mxu0
        %2184 = vmatprep.subr.bf16.mxu0 %v1900
        %2185 = vmatpush1.bf16.msra.mxu0 %v1899
        %2186 = vmatprep.subr.bf16.mxu0 %v1896
        %2187 = vmatpush1.bf16.msra.mxu0 %v1895
        %2188 = vmatprep.subr.bf16.mxu0 %v1892
        %2189 = vmatpush1.bf16.msra.mxu0 %v1891
        %2190 = vmatprep.subr.bf16.mxu0 %v1888
        %2191 = vmatpush1.bf16.msra.mxu0 %v1887
        %2192 = vmatprep.subr.bf16.mxu0 %v1884
        %2193 = vmatpush1.bf16.msra.mxu0 %v1883
        %2194 = vmatprep.subr.bf16.mxu0 %v1880
        %2195 = vmatpush1.bf16.msra.mxu0 %v1879
        %2196 = vmatprep.subr.bf16.mxu0 %v1876
        %2197 = vmatpush1.bf16.msra.mxu0 %v1875
        %2198 = vmatprep.subr.bf16.mxu0 %v1872
        %2199 = vmatpush1.bf16.msra.mxu0 %v1871
        %2200 = vmatprep.subr.bf16.mxu0 %v1932
        %2201 = vmatpush2.bf16.msra.mxu0 %v1931
        %2202 = vmatprep.subr.bf16.mxu0 %v1928
        %2203 = vmatpush2.bf16.msra.mxu0 %v1927
        %2204 = vmatprep.subr.bf16.mxu0 %v1924
        %2205 = vmatpush2.bf16.msra.mxu0 %v1923
        %2206 = vmatprep.subr.bf16.mxu0 %v1920
        %2207 = vmatpush2.bf16.msra.mxu0 %v1919
        %2208 = vmatprep.subr.bf16.mxu0 %v1916
        %2209 = vmatpush2.bf16.msra.mxu0 %v1915
        %2210 = vmatprep.subr.bf16.mxu0 %v1912
        %2211 = vmatpush2.bf16.msra.mxu0 %v1911
        %2212 = vmatprep.subr.bf16.mxu0 %v1908
        %2213 = vmatpush2.bf16.msra.mxu0 %v1907
        %2214 = vmatprep.subr.bf16.mxu0 %v1904
        %2215 = vmatpush2.bf16.msra.mxu0 %v1903
        %2216 = vmatprep.mubr.bf16.mxu0 %v1416
        %2217 = vmatmul.mubr.bf16.gmra.mxu0 %v1415
        %v2218 = vpop.f32.mrf.mxu0
        %v2219 = vadd.f32 %v2178, %v2218
        %v2220 = vpop.f32.mrf.mxu0
        %v2221 = vadd.f32 %v2180, %v2220
        %v2222 = vpop.f32.mrf.mxu0
        %v2223 = vpop.f32.mrf.mxu0
        %2224 = vdwg.mxu0
        %v2225 = vld [vmem:[%s3] sm:$0xff]
        %2227 = vset.pattern.permute.xlu0 0
        %2228 = vperm.xlu0 %2227, %v2225
        %v2229 = vpop.permute.xlu0 %2228
        %v2231 = vmul.f32 %v2137, %v2229
        %v2232 = vmul.f32 %v2139, %v2229
        %v2233 = vmul.f32 %v2219, %v2229
        %v2234 = vmul.f32 %v2221, %v2229
        %v2235 = vmul.f32 %v2231, %v1401
        %v2236 = vmul.f32 %v2232, %v1402
        %v2237 = vmul.f32 %v2233, %v1403
        %v2238 = vmul.f32 %v2234, %v1404
        %v2239 = vmax.f32 %v2235, -1.0
        %v2240 = vmax.f32 %v2236, -1.0
        %v2241 = vmax.f32 %v2237, -1.0
        %v2242 = vmax.f32 %v2238, -1.0
        %v2243 = vmin.f32 %v2239, 1.0
        %v2244 = vmin.f32 %v2240, 1.0
        %v2245 = vmin.f32 %v2241, 1.0
        %v2246 = vmin.f32 %v2242, 1.0
        %v2247 = vmul.f32 %v2243, 64.0
        %v2248 = vmul.f32 %v2244, 64.0
        %v2249 = vmul.f32 %v2245, 64.0
        %v2250 = vmul.f32 %v2246, 64.0
        loop: start=0, step=1, limit=8
        $region60: #{arcface_forward.1} parent=54 // loop_pre_header
          _
        $region61: #{arcface_forward.1} parent=54 // loop_header
          %s2252 = sphi 0, %s2256
          %p2253 = scmp.ge.s32.totalorder %s2252, 8
          %s2257 = sphi 0, %s2264
        $region62: #{arcface_forward.1} parent=54 // loop_header_branch
          %2255 = sbr.rel (%p2253) target = $region66
        $region63: #{arcface_forward.1} parent=54 // loop_body
          %s2258 = sld [smem:[#allocation3 + %s2252]]
          %p2259 = scmp.ge.s32.totalorder %s2258, %s479
          %p2260 = scmp.lt.s32.totalorder %s2258, %s480
          %p2261 = pnand %p2259, %p2260
          %p2262 = pneg %p2261
          %s2263 = scalar_select %p2262, 1, 0
          %s2264 = sor.u32 %s2257, %s2263
        $region64: #{arcface_forward.1} parent=54 // loop_footer
          %s2256 = sadd.s32 1, %s2252
        $region65: #{arcface_forward.1} parent=54 // loop_footer_branch
          %2251 = sbr.rel target = $region61
        $region66: #{arcface_forward.1} parent=54 // loop_exit
          _
        %p2265 = scmp.gt.s32.totalorder %s2257, 0
        %p2266 = scmp.le.s32.totalorder %s2257, 0
        // Predicated region
        $region67: #{arcface_forward.1} parent=54 // pred_check
          %p2267 = pneg %p2266
        $region68: #{arcface_forward.1} parent=54 // pred_check_branch
          %2269 = sbr.rel (%p2267) target = $region70
        $region69: #{arcface_forward.1} parent=54 // pred_region
          %2270 = vst [vmem:[%s476] sm:$0xff] %v2247
          %2271 = vst [vmem:[%s476 + $0x8] sm:$0xff] %v2248
          %2272 = vst [vmem:[%s476 + $0x10] sm:$0xff] %v2249
          %2273 = vst [vmem:[%s476 + $0x18] sm:$0xff] %v2250
        $region70: #{arcface_forward.1} parent=54 // pred_fallthru
          _
        // Predicated region
        $region71: #{arcface_forward.1} parent=54 // pred_check
          %p2274 = pneg %p2265
        $region72: #{arcface_forward.1} parent=54 // pred_check_branch
          %2276 = sbr.rel (%p2274) target = $region74
        $region73: #{arcface_forward.1} parent=54 // pred_region
          %v2277 = vmul.f32 %v2243, %v2243
          %v2278 = vmul.f32 %v2244, %v2244
          %v2279 = vmul.f32 %v2245, %v2245
          %v2280 = vmul.f32 %v2246, %v2246
          %v2281 = vsub.f32 1.0, %v2277
          %v2282 = vsub.f32 1.0, %v2278
          %v2283 = vsub.f32 1.0, %v2279
          %v2284 = vsub.f32 1.0, %v2280
          %v2285 = vmax.f32 %v2281, 0.0
          %v2286 = vmax.f32 %v2282, 0.0
          %v2287 = vmax.f32 %v2283, 0.0
          %v2288 = vmax.f32 %v2284, 0.0
          %v2289 = vrsqrt.pop %v2285
          %v2290 = vmul.f32 %v2285, %v2289
          %vm2291 = vcmp.eq.f32.partialorder %v2285, inf
          %v2292 = vsel %vm2291, %v2285, %v2290
          %vm2293 = vcmp.eq.f32.partialorder %v2285, 0.0
          %v2294 = vand.u32 %v2285, 2147483648
          %v2295 = vsel %vm2293, %v2294, %v2292
          %v2296 = vrsqrt.pop %v2286
          %v2297 = vmul.f32 %v2286, %v2296
          %vm2298 = vcmp.eq.f32.partialorder %v2286, inf
          %v2299 = vsel %vm2298, %v2286, %v2297
          %vm2300 = vcmp.eq.f32.partialorder %v2286, 0.0
          %v2301 = vand.u32 %v2286, 2147483648
          %v2302 = vsel %vm2300, %v2301, %v2299
          %v2303 = vrsqrt.pop %v2287
          %v2304 = vmul.f32 %v2287, %v2303
          %vm2305 = vcmp.eq.f32.partialorder %v2287, inf
          %v2306 = vsel %vm2305, %v2287, %v2304
          %vm2307 = vcmp.eq.f32.partialorder %v2287, 0.0
          %v2308 = vand.u32 %v2287, 2147483648
          %v2309 = vsel %vm2307, %v2308, %v2306
          %v2310 = vrsqrt.pop %v2288
          %v2311 = vmul.f32 %v2288, %v2310
          %vm2312 = vcmp.eq.f32.partialorder %v2288, inf
          %v2313 = vsel %vm2312, %v2288, %v2311
          %vm2314 = vcmp.eq.f32.partialorder %v2288, 0.0
          %v2315 = vand.u32 %v2288, 2147483648
          %v2316 = vsel %vm2314, %v2315, %v2313
          %v2317 = vmul.f32 %v2243, 0.87758255
          %v2318 = vmul.f32 %v2244, 0.87758255
          %v2319 = vmul.f32 %v2245, 0.87758255
          %v2320 = vmul.f32 %v2246, 0.87758255
          %v2321 = vmul.f32 %v2295, 0.47942555
          %v2322 = vmul.f32 %v2302, 0.47942555
          %v2323 = vmul.f32 %v2309, 0.47942555
          %v2324 = vmul.f32 %v2316, 0.47942555
          %v2325 = vsub.f32 %v2317, %v2321
          %v2326 = vsub.f32 %v2318, %v2322
          %v2327 = vsub.f32 %v2319, %v2323
          %v2328 = vsub.f32 %v2320, %v2324
          %v2329 = vsub.f32 %v2243, -0.87758255
          %v2330 = vsub.f32 %v2244, -0.87758255
          %v2331 = vsub.f32 %v2245, -0.87758255
          %v2332 = vsub.f32 %v2246, -0.87758255
          %vm2333 = vcmp.le.f32.partialorder %v2329, 0.0
          %vm2334 = vcmp.le.f32.partialorder %v2330, 0.0
          %vm2335 = vcmp.le.f32.partialorder %v2331, 0.0
          %vm2336 = vcmp.le.f32.partialorder %v2332, 0.0
          %v2337 = vsub.f32 %v2243, 0.23971277
          %v2338 = vsub.f32 %v2244, 0.23971277
          %v2339 = vsub.f32 %v2245, 0.23971277
          %v2340 = vsub.f32 %v2246, 0.23971277
          %v2341 = vsel %vm2333, %v2337, %v2325
          %v2342 = vsel %vm2334, %v2338, %v2326
          %v2343 = vsel %vm2335, %v2339, %v2327
          %v2344 = vsel %vm2336, %v2340, %v2328
          %v2345 = vlaneseq
          %v2346 = vand.u32 %v2345, 127
          %v2347 = vadd.s32 %v2346, 128
          %v2348 = vadd.s32 %v2346, 256
          %v2349 = vadd.s32 %v2346, 384
          %v2350 = vstv %s479
          %v2351 = vadd.s32 %v2346, %v2350
          %v2352 = vadd.s32 %v2347, %v2350
          %v2353 = vadd.s32 %v2348, %v2350
          %v2354 = vadd.s32 %v2349, %v2350
          %v2355 = vld [vmem:[%s4] sm:$0xff]
          %2356 = vset.pattern.permute.xlu0 0
          %2357 = vperm.xlu0 %2356, %v2355
          %v2358 = vpop.permute.xlu0 %2357
          %vm2359 = vcmp.eq.s32.totalorder %v2358, %v2351
          %vm2360 = vcmp.eq.s32.totalorder %v2358, %v2352
          %vm2361 = vcmp.eq.s32.totalorder %v2358, %v2353
          %vm2362 = vcmp.eq.s32.totalorder %v2358, %v2354
          %v2363 = vmul.f32 %v2341, 64.0
          %v2364 = vmul.f32 %v2342, 64.0
          %v2365 = vmul.f32 %v2343, 64.0
          %v2366 = vmul.f32 %v2344, 64.0
          %v2367 = vsel %vm2359, %v2363, %v2247
          %v2368 = vsel %vm2360, %v2364, %v2248
          %v2369 = vsel %vm2361, %v2365, %v2249
          %v2370 = vsel %vm2362, %v2366, %v2250
          %2371 = vst [vmem:[%s476] sm:$0xff] %v2367
          %2372 = vst [vmem:[%s476 + $0x8] sm:$0xff] %v2368
          %2373 = vst [vmem:[%s476 + $0x10] sm:$0xff] %v2369
          %2374 = vst [vmem:[%s476 + $0x18] sm:$0xff] %v2370
        $region74: #{arcface_forward.1} parent=54 // pred_fallthru
          _
        %s2375 = sand.u32 %s122, 1
        %s2376 = scalar_lea.sflag [#allocation6], %s2375
        %s2377 = sand.u32 %s122, 1
        %s2378 = smul.addr %s2377, 32
        %s2379 = scalar_lea.vmem [#allocation5], %s2378
        // Predicated region
        $region75: #{arcface_forward.1} parent=54 // pred_check
          %p2380 = pneg %p132
        $region76: #{arcface_forward.1} parent=54 // pred_check_branch
          %2382 = sbr.rel (%p2380) target = $region78
        $region77: #{arcface_forward.1} parent=54 // pred_region
          %s2383 = smul.u32 4, %s25
          %s2385 = ssub.s32 512, 512
          %2386 = vsyncadd %s2376, %s2385
          %s2387 = smul.addr %s2383, 128
          %s2388 = scalar_lea.hbm %s5, %s2387
          %s2390 = sshll.u32 %s2379, 4
          %s2391 = int_to_ptr.vmem [resolvable:$true] %s2390
          %2393 = dma.vmem_to_hbm [thread:$0]  %s2391, 512, %s2388, %s2376
        $region78: #{arcface_forward.1} parent=54 // pred_fallthru
          _
      $region55: #{arcface_forward.1} parent=5 // pred_fallthru
        _
      %p2394 = scmp.le.s32.totalorder 2, %s20
      // Predicated region
      $region79: #{arcface_forward.1} parent=5 // pred_check
        %p2395 = pneg %p2394
      $region80: #{arcface_forward.1} parent=5 // pred_check_branch
        %2397 = sbr.rel (%p2395) target = $region82
      $region81: #{arcface_forward.1} parent=5 // pred_region
        %s2398 = ssub.s32 %s20, 2
        // Predicated region
        $region83: #{arcface_forward.1} parent=81 // pred_check
          %p2399 = pneg %p138
        $region84: #{arcface_forward.1} parent=81 // pred_check_branch
          %2401 = sbr.rel (%p2399) target = $region86
        $region85: #{arcface_forward.1} parent=81 // pred_region
          %s2402 = sand.u32 %s123, 1
          %s2403 = scalar_lea.sflag [#allocation6], %s2402
          %s2404 = sand.u32 %s123, 1
          %s2405 = smul.addr %s2404, 32
          %s2406 = scalar_lea.vmem [#allocation5], %s2405
          %2407 = dma.done %s2403, 512
        $region86: #{arcface_forward.1} parent=81 // pred_fallthru
          _
      $region82: #{arcface_forward.1} parent=5 // pred_fallthru
        _
    $region6: #{arcface_forward.1} parent=1 // loop_footer
      %s24 = sadd.s32 1, %s20
    $region7: #{arcface_forward.1} parent=1 // loop_footer_branch
      %19 = sbr.rel target = $region3
    $region8: #{arcface_forward.1} parent=1 // loop_exit
      _
    %2408 = vsyncpa [#allocation6], 1
    %s2409 = scalar_lea.sflag [#allocation6], 1
    %2410 = vsyncpa %s2409, 1

</llo_original>
